<compile_context>
chip_gen: v7x
topology: tpu7x:2x2x1
jax: 0.10.0
libtpu: 0.0.40
codegen_flags: <defaults>
</compile_context>

<pallas_src>
import functools

import jax
import jax.numpy as jnp
from jax.experimental import pallas as pl
from jax.experimental.pallas import tpu as pltpu


_LN_EPS = 1e-5          # nn.LayerNorm default
MATMUL_DTYPE = jnp.bfloat16


def _mm(a, w):
    """MXU matmul: cast inputs to MATMUL_DTYPE, accumulate in f32."""
    return jnp.dot(a.astype(MATMUL_DTYPE), w.astype(MATMUL_DTYPE),
                   preferred_element_type=jnp.float32)


def _layer_norm(y, g, b):
    """f32 LayerNorm over the last axis (biased variance, eps=1e-5)."""
    mean = jnp.mean(y, axis=-1, keepdims=True)
    cent = y - mean
    var = jnp.mean(cent * cent, axis=-1, keepdims=True)
    return cent * jax.lax.rsqrt(var + _LN_EPS) * g + b


# ------------------------- fused whole-model kernel ------------------------- #

def _transformer_kernel(x_ref, h_ref, w_emb_ref, b_emb_ref, w_top_ref, b_top_ref,
                        wqkv_ref, w_uni_ref, b_uni_ref, ln1_g_ref, ln1_b_ref,
                        ff_w1_ref, ff_b1_ref, ff_w2_ref, ff_b2_ref,
                        ln2_g_ref, ln2_b_ref,
                        out_ref, tokens_ref,
                        *, batch, tx, th, seq, emb, heads, depth, scale, tok_pad):
    he = heads * emb
    rows = batch * seq

    # Token embedding for all batches in a single MXU matmul (x pre-flattened).
    tok_all = _mm(x_ref[...], w_emb_ref[...]) + b_emb_ref[...]        # (b*tx, emb) f32

    # Build concat(tokens, h) per batch entirely in registers.
    pieces = []
    for bb in range(batch):
        pieces.append(tok_all[bb * tx:(bb + 1) * tx, :])
        pieces.append(h_ref[bb])                                      # (th, emb)
    xcur = jnp.concatenate(pieces, axis=0)                            # (b*seq, emb)

    # Single lane-dense store of the `tokens` output.
    if tok_pad > emb:
        tokens_ref[...] = jnp.concatenate(
            [xcur, jnp.zeros((rows, tok_pad - emb), jnp.float32)], axis=-1)
    else:
        tokens_ref[...] = xcur

    # ---------------------------- transformer blocks -------------------------
    for d in range(depth):
        # Fused, bias-free Q/K/V projection: (rows, 3*heads*emb).
        qkv = _mm(xcur, wqkv_ref[d])
        q_all = qkv[:, :he]
        k_all = qkv[:, he:2 * he]
        v_all = qkv[:, 2 * he:3 * he]

        # Per-(batch, head) QK^T logits; stack so the softmax is one batched pass.
        logit_tiles = []
        for bb in range(batch):
            for hh in range(heads):
                q = q_all[bb * seq:(bb + 1) * seq, hh * emb:(hh + 1) * emb]
                k = k_all[bb * seq:(bb + 1) * seq, hh * emb:(hh + 1) * emb]
                logit_tiles.append(
                    jax.lax.dot_general(
                        q.astype(MATMUL_DTYPE), k.astype(MATMUL_DTYPE),
                        (((1,), (1,)), ((), ())),
                        preferred_element_type=jnp.float32) * scale)
        logits = jnp.concatenate(logit_tiles, axis=0)                 # (b*heads*seq, seq)
        logits = logits - jnp.max(logits, axis=-1, keepdims=True)
        p = jnp.exp(logits)
        p = p * pl.reciprocal(jnp.sum(p, axis=-1, keepdims=True), approx=True)

        # p @ v per (batch, head); heads concatenated in registers (no scratch).
        o_batches = []
        for bb in range(batch):
            head_outs = []
            for hh in range(heads):
                idx = (bb * heads + hh) * seq
                p_bh = p[idx:idx + seq, :]
                v_bh = v_all[bb * seq:(bb + 1) * seq, hh * emb:(hh + 1) * emb]
                head_outs.append(jnp.dot(p_bh.astype(MATMUL_DTYPE),
                                         v_bh.astype(MATMUL_DTYPE),
                                         preferred_element_type=jnp.float32))
            o_batches.append(jnp.concatenate(head_outs, axis=-1))     # (seq, he)
        o_all = jnp.concatenate(o_batches, axis=0)                    # (rows, he)

        attended = _mm(o_all, w_uni_ref[d]) + b_uni_ref[d]
        y = _layer_norm(attended + xcur, ln1_g_ref[d], ln1_b_ref[d])
        # dropout p=0.0 -> identity
        hidden = jnp.maximum(_mm(y, ff_w1_ref[d]) + ff_b1_ref[d], 0.0)
        ff_out = _mm(hidden, ff_w2_ref[d]) + ff_b2_ref[d]
        xcur = _layer_norm(ff_out + y, ln2_g_ref[d], ln2_b_ref[d])

    # Lane-dense top projection (output padded to a multiple of 128 lanes).
    out_ref[...] = _mm(xcur, w_top_ref[...]) + b_top_ref[...]


# --------------------------- one-time weight packing ------------------------- #

def pack_params(params, heads):
    """Pack / pad / cast weights ONCE, outside the per-call jitted path."""
    del heads
    emb = params["w_emb"].shape[1]
    out_dim = params["w_top"].shape[1]
    out_pad = ((out_dim + 127) // 128) * 128
    wdt = MATMUL_DTYPE
    blocks = params["blocks"]

    w_top_pad = jnp.zeros((emb, out_pad), jnp.float32).at[:, :out_dim].set(params["w_top"])
    b_top_pad = jnp.zeros((1, out_pad), jnp.float32).at[:, :out_dim].set(params["b_top"])

    stack = lambda xs: jnp.stack(xs, axis=0)
    packed = {
        "w_emb": params["w_emb"].astype(wdt),
        "b_emb": params["b_emb"].reshape(1, emb),
        "w_top": w_top_pad.astype(wdt),
        "b_top": b_top_pad,
        "wqkv": stack([jnp.concatenate([b["attn"]["wq"], b["attn"]["wk"], b["attn"]["wv"]],
                                       axis=1) for b in blocks]).astype(wdt),
        "w_unify": stack([b["attn"]["w_unify"] for b in blocks]).astype(wdt),
        "b_unify": stack([b["attn"]["b_unify"].reshape(1, emb) for b in blocks]),
        "ln1_g": stack([b["ln1_g"].reshape(1, emb) for b in blocks]),
        "ln1_b": stack([b["ln1_b"].reshape(1, emb) for b in blocks]),
        "ff_w1": stack([b["ff_w1"] for b in blocks]).astype(wdt),
        "ff_b1": stack([b["ff_b1"].reshape(1, -1) for b in blocks]),
        "ff_w2": stack([b["ff_w2"] for b in blocks]).astype(wdt),
        "ff_b2": stack([b["ff_b2"].reshape(1, emb) for b in blocks]),
        "ln2_g": stack([b["ln2_g"].reshape(1, emb) for b in blocks]),
        "ln2_b": stack([b["ln2_b"].reshape(1, emb) for b in blocks]),
    }
    return packed


# ------------------------------ model wrapper ------------------------------- #

def transformer_forward(packed, x, h, mask, *, heads, out_dim):
    """Matches Transformer.forward(x, h, mask) -> (probs, tokens)."""
    del mask  # blocks built with mask=False; runtime mask only passed through
    b, tx, input_dim = x.shape
    _, th, emb = h.shape
    seq = tx + th
    depth = packed["wqkv"].shape[0]
    out_pad = packed["w_top"].shape[1]
    tok_pad = ((emb + 127) // 128) * 128

    x2d = x.reshape(b * tx, input_dim)

    inputs = [
        x2d, h,
        packed["w_emb"], packed["b_emb"], packed["w_top"], packed["b_top"],
        packed["wqkv"], packed["w_unify"], packed["b_unify"],
        packed["ln1_g"], packed["ln1_b"],
        packed["ff_w1"], packed["ff_b1"], packed["ff_w2"], packed["ff_b2"],
        packed["ln2_g"], packed["ln2_b"],
    ]

    kern = functools.partial(
        _transformer_kernel,
        batch=b, tx=tx, th=th, seq=seq, emb=emb, heads=heads, depth=depth,
        scale=1.0 / float(emb) ** 0.5, tok_pad=tok_pad,
    )

    def full_spec(arr):
        nd = arr.ndim
        return pl.BlockSpec(arr.shape, lambda i, _nd=nd: (0,) * _nd)

    out_flat, tokens_flat = pl.pallas_call(
        kern,
        grid=(1,),
        in_specs=[full_spec(a) for a in inputs],
        out_specs=(
            pl.BlockSpec((b * seq, out_pad), lambda i: (0, 0)),
            pl.BlockSpec((b * seq, tok_pad), lambda i: (0, 0)),
        ),
        out_shape=(
            jax.ShapeDtypeStruct((b * seq, out_pad), jnp.float32),
            jax.ShapeDtypeStruct((b * seq, tok_pad), jnp.float32),
        ),
        compiler_params=pltpu.CompilerParams(dimension_semantics=("arbitrary",)),
    )(*inputs)

    out = out_flat[:, :out_dim].reshape(b, seq, out_dim)
    tokens = tokens_flat[:, :emb].reshape(b, seq, emb)
    return out, tokens


# -------------------------- pure-JAX f32 reference -------------------------- #

def _ref_ln(y, g, b):
    m = y.mean(-1, keepdims=True)
    v = ((y - m) ** 2).mean(-1, keepdims=True)
    return (y - m) / jnp.sqrt(v + 1e-5) * g + b


def reference_forward(params, x, h, heads):
    b = x.shape[0]
    emb = params["w_emb"].shape[1]
    tokens = x @ params["w_emb"] + params["b_emb"]
    tokens = jnp.concatenate([tokens, h], axis=1)
    t = tokens.shape[1]
    xcur = tokens
    for p in params["blocks"]:
        a = p["attn"]
        q = (xcur @ a["wq"]).reshape(b, t, heads, emb).transpose(0, 2, 1, 3)
        k = (xcur @ a["wk"]).reshape(b, t, heads, emb).transpose(0, 2, 1, 3)
        v = (xcur @ a["wv"]).reshape(b, t, heads, emb).transpose(0, 2, 1, 3)
        dot = jnp.einsum("bhqe,bhke->bhqk", q, k) / jnp.sqrt(float(emb))
        w = jax.nn.softmax(dot, axis=-1)
        o = jnp.einsum("bhqk,bhke->bhqe", w, v).transpose(0, 2, 1, 3)
        o = o.reshape(b, t, heads * emb) @ a["w_unify"] + a["b_unify"]
        xcur = _ref_ln(o + xcur, p["ln1_g"], p["ln1_b"])
        ff = jnp.maximum(xcur @ p["ff_w1"] + p["ff_b1"], 0.0) @ p["ff_w2"] + p["ff_b2"]
        xcur = _ref_ln(ff + xcur, p["ln2_g"], p["ln2_b"])
    out = xcur @ params["w_top"] + params["b_top"]
    return out, tokens


# -------------------------------- parameters -------------------------------- #

def init_params(key, input_dim, emb, heads, depth, output_dim):
    keys = jax.random.split(key, 4 + depth)

    def nrm(k, shape, scale=0.1):
        return jax.random.normal(k, shape, jnp.float32) * scale

    params = {
        "w_emb": nrm(keys[0], (input_dim, emb)),
        "b_emb": nrm(keys[1], (emb,)),
        "w_top": nrm(keys[2], (emb, output_dim)),
        "b_top": nrm(keys[3], (output_dim,)),
        "blocks": [],
    }
    for d in range(depth):
        bk = jax.random.split(keys[4 + d], 9)
        params["blocks"].append({
            "attn": {
                "wq": nrm(bk[0], (emb, emb * heads)),
                "wk": nrm(bk[1], (emb, emb * heads)),
                "wv": nrm(bk[2], (emb, emb * heads)),
                "w_unify": nrm(bk[3], (heads * emb, emb)),
                "b_unify": nrm(bk[4], (emb,)),
            },
            "ln1_g": jnp.ones((emb,), jnp.float32),
            "ln1_b": jnp.zeros((emb,), jnp.float32),
            "ff_w1": nrm(bk[5], (emb, 4 * emb)),
            "ff_b1": nrm(bk[6], (4 * emb,)),
            "ff_w2": nrm(bk[7], (4 * emb, emb)),
            "ff_b2": nrm(bk[8], (emb,)),
            "ln2_g": jnp.ones((emb,), jnp.float32),
            "ln2_b": jnp.zeros((emb,), jnp.float32),
        })
    return params


# ----------------------------------- main ------------------------------------ #

if __name__ == "__main__":
    B, TX, TH = 2, 6, 2            # tokens seq + h seq -> total seq T = 8
    INPUT_DIM, EMB, HEADS, DEPTH, OUT_DIM = 10, 32, 2, 2, 5

    key = jax.random.PRNGKey(0)
    kx, kh, kp = jax.random.split(key, 3)
    x = jax.random.normal(kx, (B, TX, INPUT_DIM), jnp.float32)
    h = jax.random.normal(kh, (B, TH, EMB), jnp.float32)

    params = init_params(kp, INPUT_DIM, EMB, HEADS, DEPTH, OUT_DIM)
    packed = pack_params(params, HEADS)          # one-time packing, off the hot path
    jax.block_until_ready(packed["wqkv"])

    fwd = jax.jit(functools.partial(transformer_forward, heads=HEADS, out_dim=OUT_DIM))
    out, tokens = fwd(packed, x, h, None)
    jax.block_until_ready(out)
    jax.block_until_ready(tokens)

    ref_out, ref_tokens = reference_forward(params, x, h, HEADS)
    assert out.shape == (B, TX + TH, OUT_DIM)
    assert tokens.shape == (B, TX + TH, EMB)
    # Tolerances account for bf16 MXU inputs (f32 accumulation) vs. the f32 reference.
    assert jnp.allclose(tokens, ref_tokens, atol=2e-2, rtol=2e-2)
    assert jnp.allclose(out, ref_out, atol=5e-2, rtol=5e-2)

    print("KERNEL_OK")
</pallas_src>

<mosaic_0001>
module attributes {stable_mosaic.version = 11 : i64} {
  func.func @_transformer_kernel(%arg0: i32, %arg1: memref<12x10xf32, #tpu.memory_space<vmem>>, %arg2: memref<2x2x32xf32, #tpu.memory_space<vmem>>, %arg3: memref<10x32xbf16, #tpu.memory_space<vmem>>, %arg4: memref<1x32xf32, #tpu.memory_space<vmem>>, %arg5: memref<32x128xbf16, #tpu.memory_space<vmem>>, %arg6: memref<1x128xf32, #tpu.memory_space<vmem>>, %arg7: memref<2x32x192xbf16, #tpu.memory_space<vmem>>, %arg8: memref<2x64x32xbf16, #tpu.memory_space<vmem>>, %arg9: memref<2x1x32xf32, #tpu.memory_space<vmem>>, %arg10: memref<2x1x32xf32, #tpu.memory_space<vmem>>, %arg11: memref<2x1x32xf32, #tpu.memory_space<vmem>>, %arg12: memref<2x32x128xbf16, #tpu.memory_space<vmem>>, %arg13: memref<2x1x128xf32, #tpu.memory_space<vmem>>, %arg14: memref<2x128x32xbf16, #tpu.memory_space<vmem>>, %arg15: memref<2x1x32xf32, #tpu.memory_space<vmem>>, %arg16: memref<2x1x32xf32, #tpu.memory_space<vmem>>, %arg17: memref<2x1x32xf32, #tpu.memory_space<vmem>>, %arg18: memref<16x128xf32, #tpu.memory_space<vmem>>, %arg19: memref<16x128xf32, #tpu.memory_space<vmem>>) attributes {dimension_semantics = [#tpu.dimension_semantics<arbitrary>], iteration_bounds = array<i64: 1>, scalar_prefetch = 0 : i64, scratch_operands = 0 : i64, tpu.core_type = #tpu.core_type<tc>, window_params = [{pipeline_mode = #tpu.pipeline_mode<synchronous>, transform_indices = @transform_0, window_bounds = array<i64: 12, 10>}, {pipeline_mode = #tpu.pipeline_mode<synchronous>, transform_indices = @transform_1, window_bounds = array<i64: 2, 2, 32>}, {pipeline_mode = #tpu.pipeline_mode<synchronous>, transform_indices = @transform_2, window_bounds = array<i64: 10, 32>}, {pipeline_mode = #tpu.pipeline_mode<synchronous>, transform_indices = @transform_3, window_bounds = array<i64: 1, 32>}, {pipeline_mode = #tpu.pipeline_mode<synchronous>, transform_indices = @transform_4, window_bounds = array<i64: 32, 128>}, {pipeline_mode = #tpu.pipeline_mode<synchronous>, transform_indices = @transform_5, window_bounds = array<i64: 1, 128>}, {pipeline_mode = #tpu.pipeline_mode<synchronous>, transform_indices = @transform_6, window_bounds = array<i64: 2, 32, 192>}, {pipeline_mode = #tpu.pipeline_mode<synchronous>, transform_indices = @transform_7, window_bounds = array<i64: 2, 64, 32>}, {pipeline_mode = #tpu.pipeline_mode<synchronous>, transform_indices = @transform_8, window_bounds = array<i64: 2, 1, 32>}, {pipeline_mode = #tpu.pipeline_mode<synchronous>, transform_indices = @transform_9, window_bounds = array<i64: 2, 1, 32>}, {pipeline_mode = #tpu.pipeline_mode<synchronous>, transform_indices = @transform_10, window_bounds = array<i64: 2, 1, 32>}, {pipeline_mode = #tpu.pipeline_mode<synchronous>, transform_indices = @transform_11, window_bounds = array<i64: 2, 32, 128>}, {pipeline_mode = #tpu.pipeline_mode<synchronous>, transform_indices = @transform_12, window_bounds = array<i64: 2, 1, 128>}, {pipeline_mode = #tpu.pipeline_mode<synchronous>, transform_indices = @transform_13, window_bounds = array<i64: 2, 128, 32>}, {pipeline_mode = #tpu.pipeline_mode<synchronous>, transform_indices = @transform_14, window_bounds = array<i64: 2, 1, 32>}, {pipeline_mode = #tpu.pipeline_mode<synchronous>, transform_indices = @transform_15, window_bounds = array<i64: 2, 1, 32>}, {pipeline_mode = #tpu.pipeline_mode<synchronous>, transform_indices = @transform_16, window_bounds = array<i64: 2, 1, 32>}, {pipeline_mode = #tpu.pipeline_mode<synchronous>, transform_indices = @transform_17, window_bounds = array<i64: 16, 128>}, {pipeline_mode = #tpu.pipeline_mode<synchronous>, transform_indices = @transform_18, window_bounds = array<i64: 16, 128>}]} {
    %c0 = arith.constant 0 : index
    %c0_0 = arith.constant 0 : index
    %0 = vector.load %arg1[%c0, %c0_0] : memref<12x10xf32, #tpu.memory_space<vmem>>, vector<12x10xf32>
    %c0_1 = arith.constant 0 : index
    %c0_2 = arith.constant 0 : index
    %1 = vector.load %arg3[%c0_1, %c0_2] : memref<10x32xbf16, #tpu.memory_space<vmem>>, vector<10x32xbf16>
    %2 = arith.truncf %0 : vector<12x10xf32> to vector<12x10xbf16>
    %cst = arith.constant dense<0.000000e+00> : vector<12x32xf32>
    %3 = tpu.matmul %2, %1, %cst {dimension_numbers = #tpu.dot_dimension_numbers<[1], [0], [0], [1], [0, 0, 1, 1], [], []>} : vector<12x10xbf16>, vector<10x32xbf16>, vector<12x32xf32> -> vector<12x32xf32>
    %c0_3 = arith.constant 0 : index
    %c0_4 = arith.constant 0 : index
    %4 = vector.load %arg4[%c0_3, %c0_4] : memref<1x32xf32, #tpu.memory_space<vmem>>, vector<1x32xf32>
    %5 = vector.broadcast %4 : vector<1x32xf32> to vector<12x32xf32>
    %6 = arith.addf %3, %5 : vector<12x32xf32>
    %7 = vector.extract_strided_slice %6 {offsets = [0, 0], sizes = [6, 32], strides = [1, 1]} : vector<12x32xf32> to vector<6x32xf32>
    %c0_5 = arith.constant 0 : index
    %c0_6 = arith.constant 0 : index
    %c0_7 = arith.constant 0 : index
    %8 = vector.load %arg2[%c0_5, %c0_6, %c0_7] : memref<2x2x32xf32, #tpu.memory_space<vmem>>, vector<1x2x32xf32>
    %9 = vector.shape_cast %8 : vector<1x2x32xf32> to vector<2x32xf32>
    %10 = vector.extract_strided_slice %6 {offsets = [6, 0], sizes = [6, 32], strides = [1, 1]} : vector<12x32xf32> to vector<6x32xf32>
    %c1 = arith.constant 1 : index
    %c0_8 = arith.constant 0 : index
    %c0_9 = arith.constant 0 : index
    %11 = vector.load %arg2[%c1, %c0_8, %c0_9] : memref<2x2x32xf32, #tpu.memory_space<vmem>>, vector<1x2x32xf32>
    %12 = vector.shape_cast %11 : vector<1x2x32xf32> to vector<2x32xf32>
    %13 = tpu.concatenate %7, %9, %10, %12 in 0 : vector<6x32xf32>, vector<2x32xf32>, vector<6x32xf32>, vector<2x32xf32> -> vector<16x32xf32>
    %cst_10 = arith.constant 0.000000e+00 : f32
    %14 = vector.broadcast %cst_10 : f32 to vector<16x96xf32>
    %15 = tpu.concatenate %13, %14 in 1 : vector<16x32xf32>, vector<16x96xf32> -> vector<16x128xf32>
    %c0_11 = arith.constant 0 : index
    %c0_12 = arith.constant 0 : index
    %16 = vector.load %arg19[%c0_11, %c0_12] : memref<16x128xf32, #tpu.memory_space<vmem>>, vector<16x128xf32>
    tpu.vector_store %arg19[%c0_11, %c0_12], %15 {strides = array<i32>} : memref<16x128xf32, #tpu.memory_space<vmem>>, vector<16x128xf32>,
    %c0_13 = arith.constant 0 : index
    %c0_14 = arith.constant 0 : index
    %c0_15 = arith.constant 0 : index
    %17 = vector.load %arg7[%c0_13, %c0_14, %c0_15] : memref<2x32x192xbf16, #tpu.memory_space<vmem>>, vector<1x32x192xbf16>
    %18 = vector.shape_cast %17 : vector<1x32x192xbf16> to vector<32x192xbf16>
    %19 = arith.truncf %13 : vector<16x32xf32> to vector<16x32xbf16>
    %cst_16 = arith.constant dense<0.000000e+00> : vector<16x192xf32>
    %20 = tpu.matmul %19, %18, %cst_16 {dimension_numbers = #tpu.dot_dimension_numbers<[1], [0], [0], [1], [0, 0, 1, 1], [], []>} : vector<16x32xbf16>, vector<32x192xbf16>, vector<16x192xf32> -> vector<16x192xf32>
    %21 = vector.extract_strided_slice %20 {offsets = [0, 0], sizes = [16, 64], strides = [1, 1]} : vector<16x192xf32> to vector<16x64xf32>
    %22 = vector.extract_strided_slice %20 {offsets = [0, 64], sizes = [16, 64], strides = [1, 1]} : vector<16x192xf32> to vector<16x64xf32>
    %23 = vector.extract_strided_slice %20 {offsets = [0, 128], sizes = [16, 64], strides = [1, 1]} : vector<16x192xf32> to vector<16x64xf32>
    %24 = vector.extract_strided_slice %21 {offsets = [0, 0], sizes = [8, 32], strides = [1, 1]} : vector<16x64xf32> to vector<8x32xf32>
    %25 = vector.extract_strided_slice %22 {offsets = [0, 0], sizes = [8, 32], strides = [1, 1]} : vector<16x64xf32> to vector<8x32xf32>
    %26 = arith.truncf %24 : vector<8x32xf32> to vector<8x32xbf16>
    %27 = arith.truncf %25 : vector<8x32xf32> to vector<8x32xbf16>
    %cst_17 = arith.constant dense<0.000000e+00> : vector<8x8xf32>
    %28 = tpu.matmul %26, %27, %cst_17 {dimension_numbers = #tpu.dot_dimension_numbers<[1], [1], [0], [0], [0, 0, 1, 0], [], []>} : vector<8x32xbf16>, vector<8x32xbf16>, vector<8x8xf32> -> vector<8x8xf32>
    %cst_18 = arith.constant 0.176776692 : f32
    %29 = vector.broadcast %cst_18 : f32 to vector<8x8xf32>
    %30 = arith.mulf %28, %29 : vector<8x8xf32>
    %31 = vector.extract_strided_slice %21 {offsets = [0, 32], sizes = [8, 32], strides = [1, 1]} : vector<16x64xf32> to vector<8x32xf32>
    %32 = vector.extract_strided_slice %22 {offsets = [0, 32], sizes = [8, 32], strides = [1, 1]} : vector<16x64xf32> to vector<8x32xf32>
    %33 = arith.truncf %31 : vector<8x32xf32> to vector<8x32xbf16>
    %34 = arith.truncf %32 : vector<8x32xf32> to vector<8x32xbf16>
    %cst_19 = arith.constant dense<0.000000e+00> : vector<8x8xf32>
    %35 = tpu.matmul %33, %34, %cst_19 {dimension_numbers = #tpu.dot_dimension_numbers<[1], [1], [0], [0], [0, 0, 1, 0], [], []>} : vector<8x32xbf16>, vector<8x32xbf16>, vector<8x8xf32> -> vector<8x8xf32>
    %cst_20 = arith.constant 0.176776692 : f32
    %36 = vector.broadcast %cst_20 : f32 to vector<8x8xf32>
    %37 = arith.mulf %35, %36 : vector<8x8xf32>
    %38 = vector.extract_strided_slice %21 {offsets = [8, 0], sizes = [8, 32], strides = [1, 1]} : vector<16x64xf32> to vector<8x32xf32>
    %39 = vector.extract_strided_slice %22 {offsets = [8, 0], sizes = [8, 32], strides = [1, 1]} : vector<16x64xf32> to vector<8x32xf32>
    %40 = arith.truncf %38 : vector<8x32xf32> to vector<8x32xbf16>
    %41 = arith.truncf %39 : vector<8x32xf32> to vector<8x32xbf16>
    %cst_21 = arith.constant dense<0.000000e+00> : vector<8x8xf32>
    %42 = tpu.matmul %40, %41, %cst_21 {dimension_numbers = #tpu.dot_dimension_numbers<[1], [1], [0], [0], [0, 0, 1, 0], [], []>} : vector<8x32xbf16>, vector<8x32xbf16>, vector<8x8xf32> -> vector<8x8xf32>
    %cst_22 = arith.constant 0.176776692 : f32
    %43 = vector.broadcast %cst_22 : f32 to vector<8x8xf32>
    %44 = arith.mulf %42, %43 : vector<8x8xf32>
    %45 = vector.extract_strided_slice %21 {offsets = [8, 32], sizes = [8, 32], strides = [1, 1]} : vector<16x64xf32> to vector<8x32xf32>
    %46 = vector.extract_strided_slice %22 {offsets = [8, 32], sizes = [8, 32], strides = [1, 1]} : vector<16x64xf32> to vector<8x32xf32>
    %47 = arith.truncf %45 : vector<8x32xf32> to vector<8x32xbf16>
    %48 = arith.truncf %46 : vector<8x32xf32> to vector<8x32xbf16>
    %cst_23 = arith.constant dense<0.000000e+00> : vector<8x8xf32>
    %49 = tpu.matmul %47, %48, %cst_23 {dimension_numbers = #tpu.dot_dimension_numbers<[1], [1], [0], [0], [0, 0, 1, 0], [], []>} : vector<8x32xbf16>, vector<8x32xbf16>, vector<8x8xf32> -> vector<8x8xf32>
    %cst_24 = arith.constant 0.176776692 : f32
    %50 = vector.broadcast %cst_24 : f32 to vector<8x8xf32>
    %51 = arith.mulf %49, %50 : vector<8x8xf32>
    %52 = tpu.concatenate %30, %37, %44, %51 in 0 : vector<8x8xf32>, vector<8x8xf32>, vector<8x8xf32>, vector<8x8xf32> -> vector<32x8xf32>
    %cst_25 = arith.constant dense<0xFF800000> : vector<32xf32>
    %53 = vector.multi_reduction <maximumf>, %52, %cst_25 [1] : vector<32x8xf32> to vector<32xf32>
    %54 = vector.shape_cast %53 : vector<32xf32> to vector<32x1xf32>
    %55 = vector.broadcast %54 : vector<32x1xf32> to vector<32x8xf32>
    %56 = arith.subf %52, %55 : vector<32x8xf32>
    %57 = math.exp %56 : vector<32x8xf32>
    %cst_26 = arith.constant dense<0.000000e+00> : vector<32xf32>
    %58 = vector.multi_reduction <add>, %57, %cst_26 [1] : vector<32x8xf32> to vector<32xf32>
    %59 = vector.shape_cast %58 : vector<32xf32> to vector<32x1xf32>
    %60 = tpu.reciprocal %59 {approx = true} : vector<32x1xf32> -> vector<32x1xf32>
    %61 = vector.broadcast %60 : vector<32x1xf32> to vector<32x8xf32>
    %62 = arith.mulf %57, %61 : vector<32x8xf32>
    %63 = vector.extract_strided_slice %62 {offsets = [0, 0], sizes = [8, 8], strides = [1, 1]} : vector<32x8xf32> to vector<8x8xf32>
    %64 = vector.extract_strided_slice %23 {offsets = [0, 0], sizes = [8, 32], strides = [1, 1]} : vector<16x64xf32> to vector<8x32xf32>
    %65 = arith.truncf %63 : vector<8x8xf32> to vector<8x8xbf16>
    %66 = arith.truncf %64 : vector<8x32xf32> to vector<8x32xbf16>
    %cst_27 = arith.constant dense<0.000000e+00> : vector<8x32xf32>
    %67 = tpu.matmul %65, %66, %cst_27 {dimension_numbers = #tpu.dot_dimension_numbers<[1], [0], [0], [1], [0, 0, 1, 1], [], []>} : vector<8x8xbf16>, vector<8x32xbf16>, vector<8x32xf32> -> vector<8x32xf32>
    %68 = vector.extract_strided_slice %62 {offsets = [8, 0], sizes = [8, 8], strides = [1, 1]} : vector<32x8xf32> to vector<8x8xf32>
    %69 = vector.extract_strided_slice %23 {offsets = [0, 32], sizes = [8, 32], strides = [1, 1]} : vector<16x64xf32> to vector<8x32xf32>
    %70 = arith.truncf %68 : vector<8x8xf32> to vector<8x8xbf16>
    %71 = arith.truncf %69 : vector<8x32xf32> to vector<8x32xbf16>
    %cst_28 = arith.constant dense<0.000000e+00> : vector<8x32xf32>
    %72 = tpu.matmul %70, %71, %cst_28 {dimension_numbers = #tpu.dot_dimension_numbers<[1], [0], [0], [1], [0, 0, 1, 1], [], []>} : vector<8x8xbf16>, vector<8x32xbf16>, vector<8x32xf32> -> vector<8x32xf32>
    %73 = tpu.concatenate %67, %72 in 1 : vector<8x32xf32>, vector<8x32xf32> -> vector<8x64xf32>
    %74 = vector.extract_strided_slice %62 {offsets = [16, 0], sizes = [8, 8], strides = [1, 1]} : vector<32x8xf32> to vector<8x8xf32>
    %75 = vector.extract_strided_slice %23 {offsets = [8, 0], sizes = [8, 32], strides = [1, 1]} : vector<16x64xf32> to vector<8x32xf32>
    %76 = arith.truncf %74 : vector<8x8xf32> to vector<8x8xbf16>
    %77 = arith.truncf %75 : vector<8x32xf32> to vector<8x32xbf16>
    %cst_29 = arith.constant dense<0.000000e+00> : vector<8x32xf32>
    %78 = tpu.matmul %76, %77, %cst_29 {dimension_numbers = #tpu.dot_dimension_numbers<[1], [0], [0], [1], [0, 0, 1, 1], [], []>} : vector<8x8xbf16>, vector<8x32xbf16>, vector<8x32xf32> -> vector<8x32xf32>
    %79 = vector.extract_strided_slice %62 {offsets = [24, 0], sizes = [8, 8], strides = [1, 1]} : vector<32x8xf32> to vector<8x8xf32>
    %80 = vector.extract_strided_slice %23 {offsets = [8, 32], sizes = [8, 32], strides = [1, 1]} : vector<16x64xf32> to vector<8x32xf32>
    %81 = arith.truncf %79 : vector<8x8xf32> to vector<8x8xbf16>
    %82 = arith.truncf %80 : vector<8x32xf32> to vector<8x32xbf16>
    %cst_30 = arith.constant dense<0.000000e+00> : vector<8x32xf32>
    %83 = tpu.matmul %81, %82, %cst_30 {dimension_numbers = #tpu.dot_dimension_numbers<[1], [0], [0], [1], [0, 0, 1, 1], [], []>} : vector<8x8xbf16>, vector<8x32xbf16>, vector<8x32xf32> -> vector<8x32xf32>
    %84 = tpu.concatenate %78, %83 in 1 : vector<8x32xf32>, vector<8x32xf32> -> vector<8x64xf32>
    %85 = tpu.concatenate %73, %84 in 0 : vector<8x64xf32>, vector<8x64xf32> -> vector<16x64xf32>
    %c0_31 = arith.constant 0 : index
    %c0_32 = arith.constant 0 : index
    %c0_33 = arith.constant 0 : index
    %86 = vector.load %arg8[%c0_31, %c0_32, %c0_33] : memref<2x64x32xbf16, #tpu.memory_space<vmem>>, vector<1x64x32xbf16>
    %87 = vector.shape_cast %86 : vector<1x64x32xbf16> to vector<64x32xbf16>
    %88 = arith.truncf %85 : vector<16x64xf32> to vector<16x64xbf16>
    %cst_34 = arith.constant dense<0.000000e+00> : vector<16x32xf32>
    %89 = tpu.matmul %88, %87, %cst_34 {dimension_numbers = #tpu.dot_dimension_numbers<[1], [0], [0], [1], [0, 0, 1, 1], [], []>} : vector<16x64xbf16>, vector<64x32xbf16>, vector<16x32xf32> -> vector<16x32xf32>
    %c0_35 = arith.constant 0 : index
    %c0_36 = arith.constant 0 : index
    %c0_37 = arith.constant 0 : index
    %90 = vector.load %arg9[%c0_35, %c0_36, %c0_37] : memref<2x1x32xf32, #tpu.memory_space<vmem>>, vector<1x1x32xf32>
    %91 = vector.shape_cast %90 : vector<1x1x32xf32> to vector<1x32xf32>
    %92 = vector.broadcast %91 : vector<1x32xf32> to vector<16x32xf32>
    %93 = arith.addf %89, %92 : vector<16x32xf32>
    %94 = arith.addf %93, %13 : vector<16x32xf32>
    %c0_38 = arith.constant 0 : index
    %c0_39 = arith.constant 0 : index
    %c0_40 = arith.constant 0 : index
    %95 = vector.load %arg10[%c0_38, %c0_39, %c0_40] : memref<2x1x32xf32, #tpu.memory_space<vmem>>, vector<1x1x32xf32>
    %96 = vector.shape_cast %95 : vector<1x1x32xf32> to vector<1x32xf32>
    %c0_41 = arith.constant 0 : index
    %c0_42 = arith.constant 0 : index
    %c0_43 = arith.constant 0 : index
    %97 = vector.load %arg11[%c0_41, %c0_42, %c0_43] : memref<2x1x32xf32, #tpu.memory_space<vmem>>, vector<1x1x32xf32>
    %98 = vector.shape_cast %97 : vector<1x1x32xf32> to vector<1x32xf32>
    %cst_44 = arith.constant dense<0.000000e+00> : vector<16xf32>
    %99 = vector.multi_reduction <add>, %94, %cst_44 [1] : vector<16x32xf32> to vector<16xf32>
    %100 = vector.shape_cast %99 : vector<16xf32> to vector<16x1xf32>
    %cst_45 = arith.constant 3.200000e+01 : f32
    %101 = vector.broadcast %cst_45 : f32 to vector<16x1xf32>
    %102 = arith.divf %100, %101 : vector<16x1xf32>
    %103 = vector.broadcast %102 : vector<16x1xf32> to vector<16x32xf32>
    %104 = arith.subf %94, %103 : vector<16x32xf32>
    %105 = arith.mulf %104, %104 : vector<16x32xf32>
    %cst_46 = arith.constant dense<0.000000e+00> : vector<16xf32>
    %106 = vector.multi_reduction <add>, %105, %cst_46 [1] : vector<16x32xf32> to vector<16xf32>
    %107 = vector.shape_cast %106 : vector<16xf32> to vector<16x1xf32>
    %cst_47 = arith.constant 3.200000e+01 : f32
    %108 = vector.broadcast %cst_47 : f32 to vector<16x1xf32>
    %109 = arith.divf %107, %108 : vector<16x1xf32>
    %cst_48 = arith.constant 9.99999974E-6 : f32
    %110 = vector.broadcast %cst_48 : f32 to vector<16x1xf32>
    %111 = arith.addf %109, %110 : vector<16x1xf32>
    %112 = math.rsqrt %111 : vector<16x1xf32>
    %113 = vector.broadcast %112 : vector<16x1xf32> to vector<16x32xf32>
    %114 = arith.mulf %104, %113 : vector<16x32xf32>
    %115 = vector.broadcast %96 : vector<1x32xf32> to vector<16x32xf32>
    %116 = arith.mulf %114, %115 : vector<16x32xf32>
    %117 = vector.broadcast %98 : vector<1x32xf32> to vector<16x32xf32>
    %118 = arith.addf %116, %117 : vector<16x32xf32>
    %c0_49 = arith.constant 0 : index
    %c0_50 = arith.constant 0 : index
    %c0_51 = arith.constant 0 : index
    %119 = vector.load %arg12[%c0_49, %c0_50, %c0_51] : memref<2x32x128xbf16, #tpu.memory_space<vmem>>, vector<1x32x128xbf16>
    %120 = vector.shape_cast %119 : vector<1x32x128xbf16> to vector<32x128xbf16>
    %121 = arith.truncf %118 : vector<16x32xf32> to vector<16x32xbf16>
    %cst_52 = arith.constant dense<0.000000e+00> : vector<16x128xf32>
    %122 = tpu.matmul %121, %120, %cst_52 {dimension_numbers = #tpu.dot_dimension_numbers<[1], [0], [0], [1], [0, 0, 1, 1], [], []>} : vector<16x32xbf16>, vector<32x128xbf16>, vector<16x128xf32> -> vector<16x128xf32>
    %c0_53 = arith.constant 0 : index
    %c0_54 = arith.constant 0 : index
    %c0_55 = arith.constant 0 : index
    %123 = vector.load %arg13[%c0_53, %c0_54, %c0_55] : memref<2x1x128xf32, #tpu.memory_space<vmem>>, vector<1x1x128xf32>
    %124 = vector.shape_cast %123 : vector<1x1x128xf32> to vector<1x128xf32>
    %125 = vector.broadcast %124 : vector<1x128xf32> to vector<16x128xf32>
    %126 = arith.addf %122, %125 : vector<16x128xf32>
    %cst_56 = arith.constant 0.000000e+00 : f32
    %127 = vector.broadcast %cst_56 : f32 to vector<16x128xf32>
    %128 = arith.maximumf %126, %127 : vector<16x128xf32>
    %c0_57 = arith.constant 0 : index
    %c0_58 = arith.constant 0 : index
    %c0_59 = arith.constant 0 : index
    %129 = vector.load %arg14[%c0_57, %c0_58, %c0_59] : memref<2x128x32xbf16, #tpu.memory_space<vmem>>, vector<1x128x32xbf16>
    %130 = vector.shape_cast %129 : vector<1x128x32xbf16> to vector<128x32xbf16>
    %131 = arith.truncf %128 : vector<16x128xf32> to vector<16x128xbf16>
    %cst_60 = arith.constant dense<0.000000e+00> : vector<16x32xf32>
    %132 = tpu.matmul %131, %130, %cst_60 {dimension_numbers = #tpu.dot_dimension_numbers<[1], [0], [0], [1], [0, 0, 1, 1], [], []>} : vector<16x128xbf16>, vector<128x32xbf16>, vector<16x32xf32> -> vector<16x32xf32>
    %c0_61 = arith.constant 0 : index
    %c0_62 = arith.constant 0 : index
    %c0_63 = arith.constant 0 : index
    %133 = vector.load %arg15[%c0_61, %c0_62, %c0_63] : memref<2x1x32xf32, #tpu.memory_space<vmem>>, vector<1x1x32xf32>
    %134 = vector.shape_cast %133 : vector<1x1x32xf32> to vector<1x32xf32>
    %135 = vector.broadcast %134 : vector<1x32xf32> to vector<16x32xf32>
    %136 = arith.addf %132, %135 : vector<16x32xf32>
    %137 = arith.addf %136, %118 : vector<16x32xf32>
    %c0_64 = arith.constant 0 : index
    %c0_65 = arith.constant 0 : index
    %c0_66 = arith.constant 0 : index
    %138 = vector.load %arg16[%c0_64, %c0_65, %c0_66] : memref<2x1x32xf32, #tpu.memory_space<vmem>>, vector<1x1x32xf32>
    %139 = vector.shape_cast %138 : vector<1x1x32xf32> to vector<1x32xf32>
    %c0_67 = arith.constant 0 : index
    %c0_68 = arith.constant 0 : index
    %c0_69 = arith.constant 0 : index
    %140 = vector.load %arg17[%c0_67, %c0_68, %c0_69] : memref<2x1x32xf32, #tpu.memory_space<vmem>>, vector<1x1x32xf32>
    %141 = vector.shape_cast %140 : vector<1x1x32xf32> to vector<1x32xf32>
    %cst_70 = arith.constant dense<0.000000e+00> : vector<16xf32>
    %142 = vector.multi_reduction <add>, %137, %cst_70 [1] : vector<16x32xf32> to vector<16xf32>
    %143 = vector.shape_cast %142 : vector<16xf32> to vector<16x1xf32>
    %cst_71 = arith.constant 3.200000e+01 : f32
    %144 = vector.broadcast %cst_71 : f32 to vector<16x1xf32>
    %145 = arith.divf %143, %144 : vector<16x1xf32>
    %146 = vector.broadcast %145 : vector<16x1xf32> to vector<16x32xf32>
    %147 = arith.subf %137, %146 : vector<16x32xf32>
    %148 = arith.mulf %147, %147 : vector<16x32xf32>
    %cst_72 = arith.constant dense<0.000000e+00> : vector<16xf32>
    %149 = vector.multi_reduction <add>, %148, %cst_72 [1] : vector<16x32xf32> to vector<16xf32>
    %150 = vector.shape_cast %149 : vector<16xf32> to vector<16x1xf32>
    %cst_73 = arith.constant 3.200000e+01 : f32
    %151 = vector.broadcast %cst_73 : f32 to vector<16x1xf32>
    %152 = arith.divf %150, %151 : vector<16x1xf32>
    %cst_74 = arith.constant 9.99999974E-6 : f32
    %153 = vector.broadcast %cst_74 : f32 to vector<16x1xf32>
    %154 = arith.addf %152, %153 : vector<16x1xf32>
    %155 = math.rsqrt %154 : vector<16x1xf32>
    %156 = vector.broadcast %155 : vector<16x1xf32> to vector<16x32xf32>
    %157 = arith.mulf %147, %156 : vector<16x32xf32>
    %158 = vector.broadcast %139 : vector<1x32xf32> to vector<16x32xf32>
    %159 = arith.mulf %157, %158 : vector<16x32xf32>
    %160 = vector.broadcast %141 : vector<1x32xf32> to vector<16x32xf32>
    %161 = arith.addf %159, %160 : vector<16x32xf32>
    %c1_75 = arith.constant 1 : index
    %c0_76 = arith.constant 0 : index
    %c0_77 = arith.constant 0 : index
    %162 = vector.load %arg7[%c1_75, %c0_76, %c0_77] : memref<2x32x192xbf16, #tpu.memory_space<vmem>>, vector<1x32x192xbf16>
    %163 = vector.shape_cast %162 : vector<1x32x192xbf16> to vector<32x192xbf16>
    %164 = arith.truncf %161 : vector<16x32xf32> to vector<16x32xbf16>
    %cst_78 = arith.constant dense<0.000000e+00> : vector<16x192xf32>
    %165 = tpu.matmul %164, %163, %cst_78 {dimension_numbers = #tpu.dot_dimension_numbers<[1], [0], [0], [1], [0, 0, 1, 1], [], []>} : vector<16x32xbf16>, vector<32x192xbf16>, vector<16x192xf32> -> vector<16x192xf32>
    %166 = vector.extract_strided_slice %165 {offsets = [0, 0], sizes = [16, 64], strides = [1, 1]} : vector<16x192xf32> to vector<16x64xf32>
    %167 = vector.extract_strided_slice %165 {offsets = [0, 64], sizes = [16, 64], strides = [1, 1]} : vector<16x192xf32> to vector<16x64xf32>
    %168 = vector.extract_strided_slice %165 {offsets = [0, 128], sizes = [16, 64], strides = [1, 1]} : vector<16x192xf32> to vector<16x64xf32>
    %169 = vector.extract_strided_slice %166 {offsets = [0, 0], sizes = [8, 32], strides = [1, 1]} : vector<16x64xf32> to vector<8x32xf32>
    %170 = vector.extract_strided_slice %167 {offsets = [0, 0], sizes = [8, 32], strides = [1, 1]} : vector<16x64xf32> to vector<8x32xf32>
    %171 = arith.truncf %169 : vector<8x32xf32> to vector<8x32xbf16>
    %172 = arith.truncf %170 : vector<8x32xf32> to vector<8x32xbf16>
    %cst_79 = arith.constant dense<0.000000e+00> : vector<8x8xf32>
    %173 = tpu.matmul %171, %172, %cst_79 {dimension_numbers = #tpu.dot_dimension_numbers<[1], [1], [0], [0], [0, 0, 1, 0], [], []>} : vector<8x32xbf16>, vector<8x32xbf16>, vector<8x8xf32> -> vector<8x8xf32>
    %cst_80 = arith.constant 0.176776692 : f32
    %174 = vector.broadcast %cst_80 : f32 to vector<8x8xf32>
    %175 = arith.mulf %173, %174 : vector<8x8xf32>
    %176 = vector.extract_strided_slice %166 {offsets = [0, 32], sizes = [8, 32], strides = [1, 1]} : vector<16x64xf32> to vector<8x32xf32>
    %177 = vector.extract_strided_slice %167 {offsets = [0, 32], sizes = [8, 32], strides = [1, 1]} : vector<16x64xf32> to vector<8x32xf32>
    %178 = arith.truncf %176 : vector<8x32xf32> to vector<8x32xbf16>
    %179 = arith.truncf %177 : vector<8x32xf32> to vector<8x32xbf16>
    %cst_81 = arith.constant dense<0.000000e+00> : vector<8x8xf32>
    %180 = tpu.matmul %178, %179, %cst_81 {dimension_numbers = #tpu.dot_dimension_numbers<[1], [1], [0], [0], [0, 0, 1, 0], [], []>} : vector<8x32xbf16>, vector<8x32xbf16>, vector<8x8xf32> -> vector<8x8xf32>
    %cst_82 = arith.constant 0.176776692 : f32
    %181 = vector.broadcast %cst_82 : f32 to vector<8x8xf32>
    %182 = arith.mulf %180, %181 : vector<8x8xf32>
    %183 = vector.extract_strided_slice %166 {offsets = [8, 0], sizes = [8, 32], strides = [1, 1]} : vector<16x64xf32> to vector<8x32xf32>
    %184 = vector.extract_strided_slice %167 {offsets = [8, 0], sizes = [8, 32], strides = [1, 1]} : vector<16x64xf32> to vector<8x32xf32>
    %185 = arith.truncf %183 : vector<8x32xf32> to vector<8x32xbf16>
    %186 = arith.truncf %184 : vector<8x32xf32> to vector<8x32xbf16>
    %cst_83 = arith.constant dense<0.000000e+00> : vector<8x8xf32>
    %187 = tpu.matmul %185, %186, %cst_83 {dimension_numbers = #tpu.dot_dimension_numbers<[1], [1], [0], [0], [0, 0, 1, 0], [], []>} : vector<8x32xbf16>, vector<8x32xbf16>, vector<8x8xf32> -> vector<8x8xf32>
    %cst_84 = arith.constant 0.176776692 : f32
    %188 = vector.broadcast %cst_84 : f32 to vector<8x8xf32>
    %189 = arith.mulf %187, %188 : vector<8x8xf32>
    %190 = vector.extract_strided_slice %166 {offsets = [8, 32], sizes = [8, 32], strides = [1, 1]} : vector<16x64xf32> to vector<8x32xf32>
    %191 = vector.extract_strided_slice %167 {offsets = [8, 32], sizes = [8, 32], strides = [1, 1]} : vector<16x64xf32> to vector<8x32xf32>
    %192 = arith.truncf %190 : vector<8x32xf32> to vector<8x32xbf16>
    %193 = arith.truncf %191 : vector<8x32xf32> to vector<8x32xbf16>
    %cst_85 = arith.constant dense<0.000000e+00> : vector<8x8xf32>
    %194 = tpu.matmul %192, %193, %cst_85 {dimension_numbers = #tpu.dot_dimension_numbers<[1], [1], [0], [0], [0, 0, 1, 0], [], []>} : vector<8x32xbf16>, vector<8x32xbf16>, vector<8x8xf32> -> vector<8x8xf32>
    %cst_86 = arith.constant 0.176776692 : f32
    %195 = vector.broadcast %cst_86 : f32 to vector<8x8xf32>
    %196 = arith.mulf %194, %195 : vector<8x8xf32>
    %197 = tpu.concatenate %175, %182, %189, %196 in 0 : vector<8x8xf32>, vector<8x8xf32>, vector<8x8xf32>, vector<8x8xf32> -> vector<32x8xf32>
    %cst_87 = arith.constant dense<0xFF800000> : vector<32xf32>
    %198 = vector.multi_reduction <maximumf>, %197, %cst_87 [1] : vector<32x8xf32> to vector<32xf32>
    %199 = vector.shape_cast %198 : vector<32xf32> to vector<32x1xf32>
    %200 = vector.broadcast %199 : vector<32x1xf32> to vector<32x8xf32>
    %201 = arith.subf %197, %200 : vector<32x8xf32>
    %202 = math.exp %201 : vector<32x8xf32>
    %cst_88 = arith.constant dense<0.000000e+00> : vector<32xf32>
    %203 = vector.multi_reduction <add>, %202, %cst_88 [1] : vector<32x8xf32> to vector<32xf32>
    %204 = vector.shape_cast %203 : vector<32xf32> to vector<32x1xf32>
    %205 = tpu.reciprocal %204 {approx = true} : vector<32x1xf32> -> vector<32x1xf32>
    %206 = vector.broadcast %205 : vector<32x1xf32> to vector<32x8xf32>
    %207 = arith.mulf %202, %206 : vector<32x8xf32>
    %208 = vector.extract_strided_slice %207 {offsets = [0, 0], sizes = [8, 8], strides = [1, 1]} : vector<32x8xf32> to vector<8x8xf32>
    %209 = vector.extract_strided_slice %168 {offsets = [0, 0], sizes = [8, 32], strides = [1, 1]} : vector<16x64xf32> to vector<8x32xf32>
    %210 = arith.truncf %208 : vector<8x8xf32> to vector<8x8xbf16>
    %211 = arith.truncf %209 : vector<8x32xf32> to vector<8x32xbf16>
    %cst_89 = arith.constant dense<0.000000e+00> : vector<8x32xf32>
    %212 = tpu.matmul %210, %211, %cst_89 {dimension_numbers = #tpu.dot_dimension_numbers<[1], [0], [0], [1], [0, 0, 1, 1], [], []>} : vector<8x8xbf16>, vector<8x32xbf16>, vector<8x32xf32> -> vector<8x32xf32>
    %213 = vector.extract_strided_slice %207 {offsets = [8, 0], sizes = [8, 8], strides = [1, 1]} : vector<32x8xf32> to vector<8x8xf32>
    %214 = vector.extract_strided_slice %168 {offsets = [0, 32], sizes = [8, 32], strides = [1, 1]} : vector<16x64xf32> to vector<8x32xf32>
    %215 = arith.truncf %213 : vector<8x8xf32> to vector<8x8xbf16>
    %216 = arith.truncf %214 : vector<8x32xf32> to vector<8x32xbf16>
    %cst_90 = arith.constant dense<0.000000e+00> : vector<8x32xf32>
    %217 = tpu.matmul %215, %216, %cst_90 {dimension_numbers = #tpu.dot_dimension_numbers<[1], [0], [0], [1], [0, 0, 1, 1], [], []>} : vector<8x8xbf16>, vector<8x32xbf16>, vector<8x32xf32> -> vector<8x32xf32>
    %218 = tpu.concatenate %212, %217 in 1 : vector<8x32xf32>, vector<8x32xf32> -> vector<8x64xf32>
    %219 = vector.extract_strided_slice %207 {offsets = [16, 0], sizes = [8, 8], strides = [1, 1]} : vector<32x8xf32> to vector<8x8xf32>
    %220 = vector.extract_strided_slice %168 {offsets = [8, 0], sizes = [8, 32], strides = [1, 1]} : vector<16x64xf32> to vector<8x32xf32>
    %221 = arith.truncf %219 : vector<8x8xf32> to vector<8x8xbf16>
    %222 = arith.truncf %220 : vector<8x32xf32> to vector<8x32xbf16>
    %cst_91 = arith.constant dense<0.000000e+00> : vector<8x32xf32>
    %223 = tpu.matmul %221, %222, %cst_91 {dimension_numbers = #tpu.dot_dimension_numbers<[1], [0], [0], [1], [0, 0, 1, 1], [], []>} : vector<8x8xbf16>, vector<8x32xbf16>, vector<8x32xf32> -> vector<8x32xf32>
    %224 = vector.extract_strided_slice %207 {offsets = [24, 0], sizes = [8, 8], strides = [1, 1]} : vector<32x8xf32> to vector<8x8xf32>
    %225 = vector.extract_strided_slice %168 {offsets = [8, 32], sizes = [8, 32], strides = [1, 1]} : vector<16x64xf32> to vector<8x32xf32>
    %226 = arith.truncf %224 : vector<8x8xf32> to vector<8x8xbf16>
    %227 = arith.truncf %225 : vector<8x32xf32> to vector<8x32xbf16>
    %cst_92 = arith.constant dense<0.000000e+00> : vector<8x32xf32>
    %228 = tpu.matmul %226, %227, %cst_92 {dimension_numbers = #tpu.dot_dimension_numbers<[1], [0], [0], [1], [0, 0, 1, 1], [], []>} : vector<8x8xbf16>, vector<8x32xbf16>, vector<8x32xf32> -> vector<8x32xf32>
    %229 = tpu.concatenate %223, %228 in 1 : vector<8x32xf32>, vector<8x32xf32> -> vector<8x64xf32>
    %230 = tpu.concatenate %218, %229 in 0 : vector<8x64xf32>, vector<8x64xf32> -> vector<16x64xf32>
    %c1_93 = arith.constant 1 : index
    %c0_94 = arith.constant 0 : index
    %c0_95 = arith.constant 0 : index
    %231 = vector.load %arg8[%c1_93, %c0_94, %c0_95] : memref<2x64x32xbf16, #tpu.memory_space<vmem>>, vector<1x64x32xbf16>
    %232 = vector.shape_cast %231 : vector<1x64x32xbf16> to vector<64x32xbf16>
    %233 = arith.truncf %230 : vector<16x64xf32> to vector<16x64xbf16>
    %cst_96 = arith.constant dense<0.000000e+00> : vector<16x32xf32>
    %234 = tpu.matmul %233, %232, %cst_96 {dimension_numbers = #tpu.dot_dimension_numbers<[1], [0], [0], [1], [0, 0, 1, 1], [], []>} : vector<16x64xbf16>, vector<64x32xbf16>, vector<16x32xf32> -> vector<16x32xf32>
    %c1_97 = arith.constant 1 : index
    %c0_98 = arith.constant 0 : index
    %c0_99 = arith.constant 0 : index
    %235 = vector.load %arg9[%c1_97, %c0_98, %c0_99] : memref<2x1x32xf32, #tpu.memory_space<vmem>>, vector<1x1x32xf32>
    %236 = vector.shape_cast %235 : vector<1x1x32xf32> to vector<1x32xf32>
    %237 = vector.broadcast %236 : vector<1x32xf32> to vector<16x32xf32>
    %238 = arith.addf %234, %237 : vector<16x32xf32>
    %239 = arith.addf %238, %161 : vector<16x32xf32>
    %c1_100 = arith.constant 1 : index
    %c0_101 = arith.constant 0 : index
    %c0_102 = arith.constant 0 : index
    %240 = vector.load %arg10[%c1_100, %c0_101, %c0_102] : memref<2x1x32xf32, #tpu.memory_space<vmem>>, vector<1x1x32xf32>
    %241 = vector.shape_cast %240 : vector<1x1x32xf32> to vector<1x32xf32>
    %c1_103 = arith.constant 1 : index
    %c0_104 = arith.constant 0 : index
    %c0_105 = arith.constant 0 : index
    %242 = vector.load %arg11[%c1_103, %c0_104, %c0_105] : memref<2x1x32xf32, #tpu.memory_space<vmem>>, vector<1x1x32xf32>
    %243 = vector.shape_cast %242 : vector<1x1x32xf32> to vector<1x32xf32>
    %cst_106 = arith.constant dense<0.000000e+00> : vector<16xf32>
    %244 = vector.multi_reduction <add>, %239, %cst_106 [1] : vector<16x32xf32> to vector<16xf32>
    %245 = vector.shape_cast %244 : vector<16xf32> to vector<16x1xf32>
    %cst_107 = arith.constant 3.200000e+01 : f32
    %246 = vector.broadcast %cst_107 : f32 to vector<16x1xf32>
    %247 = arith.divf %245, %246 : vector<16x1xf32>
    %248 = vector.broadcast %247 : vector<16x1xf32> to vector<16x32xf32>
    %249 = arith.subf %239, %248 : vector<16x32xf32>
    %250 = arith.mulf %249, %249 : vector<16x32xf32>
    %cst_108 = arith.constant dense<0.000000e+00> : vector<16xf32>
    %251 = vector.multi_reduction <add>, %250, %cst_108 [1] : vector<16x32xf32> to vector<16xf32>
    %252 = vector.shape_cast %251 : vector<16xf32> to vector<16x1xf32>
    %cst_109 = arith.constant 3.200000e+01 : f32
    %253 = vector.broadcast %cst_109 : f32 to vector<16x1xf32>
    %254 = arith.divf %252, %253 : vector<16x1xf32>
    %cst_110 = arith.constant 9.99999974E-6 : f32
    %255 = vector.broadcast %cst_110 : f32 to vector<16x1xf32>
    %256 = arith.addf %254, %255 : vector<16x1xf32>
    %257 = math.rsqrt %256 : vector<16x1xf32>
    %258 = vector.broadcast %257 : vector<16x1xf32> to vector<16x32xf32>
    %259 = arith.mulf %249, %258 : vector<16x32xf32>
    %260 = vector.broadcast %241 : vector<1x32xf32> to vector<16x32xf32>
    %261 = arith.mulf %259, %260 : vector<16x32xf32>
    %262 = vector.broadcast %243 : vector<1x32xf32> to vector<16x32xf32>
    %263 = arith.addf %261, %262 : vector<16x32xf32>
    %c1_111 = arith.constant 1 : index
    %c0_112 = arith.constant 0 : index
    %c0_113 = arith.constant 0 : index
    %264 = vector.load %arg12[%c1_111, %c0_112, %c0_113] : memref<2x32x128xbf16, #tpu.memory_space<vmem>>, vector<1x32x128xbf16>
    %265 = vector.shape_cast %264 : vector<1x32x128xbf16> to vector<32x128xbf16>
    %266 = arith.truncf %263 : vector<16x32xf32> to vector<16x32xbf16>
    %cst_114 = arith.constant dense<0.000000e+00> : vector<16x128xf32>
    %267 = tpu.matmul %266, %265, %cst_114 {dimension_numbers = #tpu.dot_dimension_numbers<[1], [0], [0], [1], [0, 0, 1, 1], [], []>} : vector<16x32xbf16>, vector<32x128xbf16>, vector<16x128xf32> -> vector<16x128xf32>
    %c1_115 = arith.constant 1 : index
    %c0_116 = arith.constant 0 : index
    %c0_117 = arith.constant 0 : index
    %268 = vector.load %arg13[%c1_115, %c0_116, %c0_117] : memref<2x1x128xf32, #tpu.memory_space<vmem>>, vector<1x1x128xf32>
    %269 = vector.shape_cast %268 : vector<1x1x128xf32> to vector<1x128xf32>
    %270 = vector.broadcast %269 : vector<1x128xf32> to vector<16x128xf32>
    %271 = arith.addf %267, %270 : vector<16x128xf32>
    %cst_118 = arith.constant 0.000000e+00 : f32
    %272 = vector.broadcast %cst_118 : f32 to vector<16x128xf32>
    %273 = arith.maximumf %271, %272 : vector<16x128xf32>
    %c1_119 = arith.constant 1 : index
    %c0_120 = arith.constant 0 : index
    %c0_121 = arith.constant 0 : index
    %274 = vector.load %arg14[%c1_119, %c0_120, %c0_121] : memref<2x128x32xbf16, #tpu.memory_space<vmem>>, vector<1x128x32xbf16>
    %275 = vector.shape_cast %274 : vector<1x128x32xbf16> to vector<128x32xbf16>
    %276 = arith.truncf %273 : vector<16x128xf32> to vector<16x128xbf16>
    %cst_122 = arith.constant dense<0.000000e+00> : vector<16x32xf32>
    %277 = tpu.matmul %276, %275, %cst_122 {dimension_numbers = #tpu.dot_dimension_numbers<[1], [0], [0], [1], [0, 0, 1, 1], [], []>} : vector<16x128xbf16>, vector<128x32xbf16>, vector<16x32xf32> -> vector<16x32xf32>
    %c1_123 = arith.constant 1 : index
    %c0_124 = arith.constant 0 : index
    %c0_125 = arith.constant 0 : index
    %278 = vector.load %arg15[%c1_123, %c0_124, %c0_125] : memref<2x1x32xf32, #tpu.memory_space<vmem>>, vector<1x1x32xf32>
    %279 = vector.shape_cast %278 : vector<1x1x32xf32> to vector<1x32xf32>
    %280 = vector.broadcast %279 : vector<1x32xf32> to vector<16x32xf32>
    %281 = arith.addf %277, %280 : vector<16x32xf32>
    %282 = arith.addf %281, %263 : vector<16x32xf32>
    %c1_126 = arith.constant 1 : index
    %c0_127 = arith.constant 0 : index
    %c0_128 = arith.constant 0 : index
    %283 = vector.load %arg16[%c1_126, %c0_127, %c0_128] : memref<2x1x32xf32, #tpu.memory_space<vmem>>, vector<1x1x32xf32>
    %284 = vector.shape_cast %283 : vector<1x1x32xf32> to vector<1x32xf32>
    %c1_129 = arith.constant 1 : index
    %c0_130 = arith.constant 0 : index
    %c0_131 = arith.constant 0 : index
    %285 = vector.load %arg17[%c1_129, %c0_130, %c0_131] : memref<2x1x32xf32, #tpu.memory_space<vmem>>, vector<1x1x32xf32>
    %286 = vector.shape_cast %285 : vector<1x1x32xf32> to vector<1x32xf32>
    %cst_132 = arith.constant dense<0.000000e+00> : vector<16xf32>
    %287 = vector.multi_reduction <add>, %282, %cst_132 [1] : vector<16x32xf32> to vector<16xf32>
    %288 = vector.shape_cast %287 : vector<16xf32> to vector<16x1xf32>
    %cst_133 = arith.constant 3.200000e+01 : f32
    %289 = vector.broadcast %cst_133 : f32 to vector<16x1xf32>
    %290 = arith.divf %288, %289 : vector<16x1xf32>
    %291 = vector.broadcast %290 : vector<16x1xf32> to vector<16x32xf32>
    %292 = arith.subf %282, %291 : vector<16x32xf32>
    %293 = arith.mulf %292, %292 : vector<16x32xf32>
    %cst_134 = arith.constant dense<0.000000e+00> : vector<16xf32>
    %294 = vector.multi_reduction <add>, %293, %cst_134 [1] : vector<16x32xf32> to vector<16xf32>
    %295 = vector.shape_cast %294 : vector<16xf32> to vector<16x1xf32>
    %cst_135 = arith.constant 3.200000e+01 : f32
    %296 = vector.broadcast %cst_135 : f32 to vector<16x1xf32>
    %297 = arith.divf %295, %296 : vector<16x1xf32>
    %cst_136 = arith.constant 9.99999974E-6 : f32
    %298 = vector.broadcast %cst_136 : f32 to vector<16x1xf32>
    %299 = arith.addf %297, %298 : vector<16x1xf32>
    %300 = math.rsqrt %299 : vector<16x1xf32>
    %301 = vector.broadcast %300 : vector<16x1xf32> to vector<16x32xf32>
    %302 = arith.mulf %292, %301 : vector<16x32xf32>
    %303 = vector.broadcast %284 : vector<1x32xf32> to vector<16x32xf32>
    %304 = arith.mulf %302, %303 : vector<16x32xf32>
    %305 = vector.broadcast %286 : vector<1x32xf32> to vector<16x32xf32>
    %306 = arith.addf %304, %305 : vector<16x32xf32>
    %c0_137 = arith.constant 0 : index
    %c0_138 = arith.constant 0 : index
    %307 = vector.load %arg5[%c0_137, %c0_138] : memref<32x128xbf16, #tpu.memory_space<vmem>>, vector<32x128xbf16>
    %308 = arith.truncf %306 : vector<16x32xf32> to vector<16x32xbf16>
    %cst_139 = arith.constant dense<0.000000e+00> : vector<16x128xf32>
    %309 = tpu.matmul %308, %307, %cst_139 {dimension_numbers = #tpu.dot_dimension_numbers<[1], [0], [0], [1], [0, 0, 1, 1], [], []>} : vector<16x32xbf16>, vector<32x128xbf16>, vector<16x128xf32> -> vector<16x128xf32>
    %c0_140 = arith.constant 0 : index
    %c0_141 = arith.constant 0 : index
    %310 = vector.load %arg6[%c0_140, %c0_141] : memref<1x128xf32, #tpu.memory_space<vmem>>, vector<1x128xf32>
    %311 = vector.broadcast %310 : vector<1x128xf32> to vector<16x128xf32>
    %312 = arith.addf %309, %311 : vector<16x128xf32>
    %c0_142 = arith.constant 0 : index
    %c0_143 = arith.constant 0 : index
    %313 = vector.load %arg18[%c0_142, %c0_143] : memref<16x128xf32, #tpu.memory_space<vmem>>, vector<16x128xf32>
    tpu.vector_store %arg18[%c0_142, %c0_143], %312 {strides = array<i32>} : memref<16x128xf32, #tpu.memory_space<vmem>>, vector<16x128xf32>,
    return
  }
  func.func @transform_0(%arg0: i32) -> (i32, i32) {
    %c0_i32 = arith.constant 0 : i32
    %c0_i32_0 = arith.constant 0 : i32
    %c0_i32_1 = arith.constant 0 : i32
    return %c0_i32, %c0_i32_0 : i32, i32
  }
  func.func @transform_1(%arg0: i32) -> (i32, i32, i32) {
    %c0_i32 = arith.constant 0 : i32
    %c0_i32_0 = arith.constant 0 : i32
    %c0_i32_1 = arith.constant 0 : i32
    %c0_i32_2 = arith.constant 0 : i32
    return %c0_i32, %c0_i32_0, %c0_i32_1 : i32, i32, i32
  }
  func.func @transform_2(%arg0: i32) -> (i32, i32) {
    %c0_i32 = arith.constant 0 : i32
    %c0_i32_0 = arith.constant 0 : i32
    %c0_i32_1 = arith.constant 0 : i32
    return %c0_i32, %c0_i32_0 : i32, i32
  }
  func.func @transform_3(%arg0: i32) -> (i32, i32) {
    %c0_i32 = arith.constant 0 : i32
    %c0_i32_0 = arith.constant 0 : i32
    %c0_i32_1 = arith.constant 0 : i32
    return %c0_i32, %c0_i32_0 : i32, i32
  }
  func.func @transform_4(%arg0: i32) -> (i32, i32) {
    %c0_i32 = arith.constant 0 : i32
    %c0_i32_0 = arith.constant 0 : i32
    %c0_i32_1 = arith.constant 0 : i32
    return %c0_i32, %c0_i32_0 : i32, i32
  }
  func.func @transform_5(%arg0: i32) -> (i32, i32) {
    %c0_i32 = arith.constant 0 : i32
    %c0_i32_0 = arith.constant 0 : i32
    %c0_i32_1 = arith.constant 0 : i32
    return %c0_i32, %c0_i32_0 : i32, i32
  }
  func.func @transform_6(%arg0: i32) -> (i32, i32, i32) {
    %c0_i32 = arith.constant 0 : i32
    %c0_i32_0 = arith.constant 0 : i32
    %c0_i32_1 = arith.constant 0 : i32
    %c0_i32_2 = arith.constant 0 : i32
    return %c0_i32, %c0_i32_0, %c0_i32_1 : i32, i32, i32
  }
  func.func @transform_7(%arg0: i32) -> (i32, i32, i32) {
    %c0_i32 = arith.constant 0 : i32
    %c0_i32_0 = arith.constant 0 : i32
    %c0_i32_1 = arith.constant 0 : i32
    %c0_i32_2 = arith.constant 0 : i32
    return %c0_i32, %c0_i32_0, %c0_i32_1 : i32, i32, i32
  }
  func.func @transform_8(%arg0: i32) -> (i32, i32, i32) {
    %c0_i32 = arith.constant 0 : i32
    %c0_i32_0 = arith.constant 0 : i32
    %c0_i32_1 = arith.constant 0 : i32
    %c0_i32_2 = arith.constant 0 : i32
    return %c0_i32, %c0_i32_0, %c0_i32_1 : i32, i32, i32
  }
  func.func @transform_9(%arg0: i32) -> (i32, i32, i32) {
    %c0_i32 = arith.constant 0 : i32
    %c0_i32_0 = arith.constant 0 : i32
    %c0_i32_1 = arith.constant 0 : i32
    %c0_i32_2 = arith.constant 0 : i32
    return %c0_i32, %c0_i32_0, %c0_i32_1 : i32, i32, i32
  }
  func.func @transform_10(%arg0: i32) -> (i32, i32, i32) {
    %c0_i32 = arith.constant 0 : i32
    %c0_i32_0 = arith.constant 0 : i32
    %c0_i32_1 = arith.constant 0 : i32
    %c0_i32_2 = arith.constant 0 : i32
    return %c0_i32, %c0_i32_0, %c0_i32_1 : i32, i32, i32
  }
  func.func @transform_11(%arg0: i32) -> (i32, i32, i32) {
    %c0_i32 = arith.constant 0 : i32
    %c0_i32_0 = arith.constant 0 : i32
    %c0_i32_1 = arith.constant 0 : i32
    %c0_i32_2 = arith.constant 0 : i32
    return %c0_i32, %c0_i32_0, %c0_i32_1 : i32, i32, i32
  }
  func.func @transform_12(%arg0: i32) -> (i32, i32, i32) {
    %c0_i32 = arith.constant 0 : i32
    %c0_i32_0 = arith.constant 0 : i32
    %c0_i32_1 = arith.constant 0 : i32
    %c0_i32_2 = arith.constant 0 : i32
    return %c0_i32, %c0_i32_0, %c0_i32_1 : i32, i32, i32
  }
  func.func @transform_13(%arg0: i32) -> (i32, i32, i32) {
    %c0_i32 = arith.constant 0 : i32
    %c0_i32_0 = arith.constant 0 : i32
    %c0_i32_1 = arith.constant 0 : i32
    %c0_i32_2 = arith.constant 0 : i32
    return %c0_i32, %c0_i32_0, %c0_i32_1 : i32, i32, i32
  }
  func.func @transform_14(%arg0: i32) -> (i32, i32, i32) {
    %c0_i32 = arith.constant 0 : i32
    %c0_i32_0 = arith.constant 0 : i32
    %c0_i32_1 = arith.constant 0 : i32
    %c0_i32_2 = arith.constant 0 : i32
    return %c0_i32, %c0_i32_0, %c0_i32_1 : i32, i32, i32
  }
  func.func @transform_15(%arg0: i32) -> (i32, i32, i32) {
    %c0_i32 = arith.constant 0 : i32
    %c0_i32_0 = arith.constant 0 : i32
    %c0_i32_1 = arith.constant 0 : i32
    %c0_i32_2 = arith.constant 0 : i32
    return %c0_i32, %c0_i32_0, %c0_i32_1 : i32, i32, i32
  }
  func.func @transform_16(%arg0: i32) -> (i32, i32, i32) {
    %c0_i32 = arith.constant 0 : i32
    %c0_i32_0 = arith.constant 0 : i32
    %c0_i32_1 = arith.constant 0 : i32
    %c0_i32_2 = arith.constant 0 : i32
    return %c0_i32, %c0_i32_0, %c0_i32_1 : i32, i32, i32
  }
  func.func @transform_17(%arg0: i32) -> (i32, i32) {
    %c0_i32 = arith.constant 0 : i32
    %c0_i32_0 = arith.constant 0 : i32
    %c0_i32_1 = arith.constant 0 : i32
    return %c0_i32, %c0_i32_0 : i32, i32
  }
  func.func @transform_18(%arg0: i32) -> (i32, i32) {
    %c0_i32 = arith.constant 0 : i32
    %c0_i32_0 = arith.constant 0 : i32
    %c0_i32_1 = arith.constant 0 : i32
    return %c0_i32, %c0_i32_0 : i32, i32
  }
}

</mosaic_0001>

<llo_original>
// kernel: transformer_forward.1
$region0: #{transformer_forward.1}
  #allocation0 [shape = 'u32[]', space=smem, size = 0x4, offset = 0x4, fixed_abs, tag = 'smem constant byte address 0x4 - core index']
  #allocation1 [shape = 'u32[144,128]{1,0:T(1,128)}', space=vmem, size = 0x12000, scoped, tag = 'internal scratch']
  %s0 = inlined_call_operand.vmem [shape: f32[12,10], index: 0, kind: input, shape index: {}]
  %s1 = inlined_call_operand.vmem [shape: f32[2,2,32], index: 1, kind: input, shape index: {}]
  %s2 = inlined_call_operand.vmem [shape: bf16[10,32], index: 2, kind: input, shape index: {}]
  %s3 = inlined_call_operand.vmem [shape: f32[1,32], index: 3, kind: input, shape index: {}]
  %s4 = inlined_call_operand.vmem [shape: bf16[32,128], index: 4, kind: input, shape index: {}]
  %s5 = inlined_call_operand.vmem [shape: f32[1,128], index: 5, kind: input, shape index: {}]
  %s6 = inlined_call_operand.vmem [shape: bf16[2,32,192], index: 6, kind: input, shape index: {}]
  %s7 = inlined_call_operand.vmem [shape: bf16[2,64,32], index: 7, kind: input, shape index: {}]
  %s8 = inlined_call_operand.vmem [shape: f32[2,1,32], index: 8, kind: input, shape index: {}]
  %s9 = inlined_call_operand.vmem [shape: f32[2,1,32], index: 9, kind: input, shape index: {}]
  %s10 = inlined_call_operand.vmem [shape: f32[2,1,32], index: 10, kind: input, shape index: {}]
  %s11 = inlined_call_operand.vmem [shape: bf16[2,32,128], index: 11, kind: input, shape index: {}]
  %s12 = inlined_call_operand.vmem [shape: f32[2,1,128], index: 12, kind: input, shape index: {}]
  %s13 = inlined_call_operand.vmem [shape: bf16[2,128,32], index: 13, kind: input, shape index: {}]
  %s14 = inlined_call_operand.vmem [shape: f32[2,1,32], index: 14, kind: input, shape index: {}]
  %s15 = inlined_call_operand.vmem [shape: f32[2,1,32], index: 15, kind: input, shape index: {}]
  %s16 = inlined_call_operand.vmem [shape: f32[2,1,32], index: 16, kind: input, shape index: {}]
  %s17 = inlined_call_operand.vmem [shape: f32[16,128], index: 17, kind: output, shape index: {0}]
  %s18 = inlined_call_operand.vmem [shape: f32[16,128], index: 18, kind: output, shape index: {1}]
  %19 = xla_tuple %s17, %s18
  %s20 = sld [smem:[#allocation0]]
  $region86: #{transformer_forward.1} parent=0
    _
  %s22 = ssub.s32 1, %s20
  %s23 = scalar_select 0, %s22, %s20
  // Predicated region
  $region2: #{transformer_forward.1} parent=0 // pred_check
    _
  $region3: #{transformer_forward.1} parent=0 // pred_check_branch
    %25 = sbr.rel (0) target = $region5
  $region4: #{transformer_forward.1} parent=0 // pred_region
    _
  $region5: #{transformer_forward.1} parent=0 // pred_fallthru
    _
  // Predicated region
  $region6: #{transformer_forward.1} parent=0 // pred_check
    _
  $region7: #{transformer_forward.1} parent=0 // pred_check_branch
    %27 = sbr.rel (0) target = $region9
  $region8: #{transformer_forward.1} parent=0 // pred_region
    _
  $region9: #{transformer_forward.1} parent=0 // pred_fallthru
    _
  // Predicated region
  $region10: #{transformer_forward.1} parent=0 // pred_check
    _
  $region11: #{transformer_forward.1} parent=0 // pred_check_branch
    %29 = sbr.rel (0) target = $region13
  $region12: #{transformer_forward.1} parent=0 // pred_region
    _
  $region13: #{transformer_forward.1} parent=0 // pred_fallthru
    _
  // Predicated region
  $region14: #{transformer_forward.1} parent=0 // pred_check
    _
  $region15: #{transformer_forward.1} parent=0 // pred_check_branch
    %31 = sbr.rel (0) target = $region17
  $region16: #{transformer_forward.1} parent=0 // pred_region
    _
  $region17: #{transformer_forward.1} parent=0 // pred_fallthru
    _
  // Predicated region
  $region18: #{transformer_forward.1} parent=0 // pred_check
    _
  $region19: #{transformer_forward.1} parent=0 // pred_check_branch
    %33 = sbr.rel (0) target = $region21
  $region20: #{transformer_forward.1} parent=0 // pred_region
    _
  $region21: #{transformer_forward.1} parent=0 // pred_fallthru
    _
  // Predicated region
  $region22: #{transformer_forward.1} parent=0 // pred_check
    _
  $region23: #{transformer_forward.1} parent=0 // pred_check_branch
    %35 = sbr.rel (0) target = $region25
  $region24: #{transformer_forward.1} parent=0 // pred_region
    _
  $region25: #{transformer_forward.1} parent=0 // pred_fallthru
    _
  // Predicated region
  $region26: #{transformer_forward.1} parent=0 // pred_check
    _
  $region27: #{transformer_forward.1} parent=0 // pred_check_branch
    %37 = sbr.rel (0) target = $region29
  $region28: #{transformer_forward.1} parent=0 // pred_region
    _
  $region29: #{transformer_forward.1} parent=0 // pred_fallthru
    _
  // Predicated region
  $region30: #{transformer_forward.1} parent=0 // pred_check
    _
  $region31: #{transformer_forward.1} parent=0 // pred_check_branch
    %39 = sbr.rel (0) target = $region33
  $region32: #{transformer_forward.1} parent=0 // pred_region
    _
  $region33: #{transformer_forward.1} parent=0 // pred_fallthru
    _
  // Predicated region
  $region34: #{transformer_forward.1} parent=0 // pred_check
    _
  $region35: #{transformer_forward.1} parent=0 // pred_check_branch
    %41 = sbr.rel (0) target = $region37
  $region36: #{transformer_forward.1} parent=0 // pred_region
    _
  $region37: #{transformer_forward.1} parent=0 // pred_fallthru
    _
  // Predicated region
  $region38: #{transformer_forward.1} parent=0 // pred_check
    _
  $region39: #{transformer_forward.1} parent=0 // pred_check_branch
    %43 = sbr.rel (0) target = $region41
  $region40: #{transformer_forward.1} parent=0 // pred_region
    _
  $region41: #{transformer_forward.1} parent=0 // pred_fallthru
    _
  // Predicated region
  $region42: #{transformer_forward.1} parent=0 // pred_check
    _
  $region43: #{transformer_forward.1} parent=0 // pred_check_branch
    %45 = sbr.rel (0) target = $region45
  $region44: #{transformer_forward.1} parent=0 // pred_region
    _
  $region45: #{transformer_forward.1} parent=0 // pred_fallthru
    _
  // Predicated region
  $region46: #{transformer_forward.1} parent=0 // pred_check
    _
  $region47: #{transformer_forward.1} parent=0 // pred_check_branch
    %47 = sbr.rel (0) target = $region49
  $region48: #{transformer_forward.1} parent=0 // pred_region
    _
  $region49: #{transformer_forward.1} parent=0 // pred_fallthru
    _
  // Predicated region
  $region50: #{transformer_forward.1} parent=0 // pred_check
    _
  $region51: #{transformer_forward.1} parent=0 // pred_check_branch
    %49 = sbr.rel (0) target = $region53
  $region52: #{transformer_forward.1} parent=0 // pred_region
    _
  $region53: #{transformer_forward.1} parent=0 // pred_fallthru
    _
  // Predicated region
  $region54: #{transformer_forward.1} parent=0 // pred_check
    _
  $region55: #{transformer_forward.1} parent=0 // pred_check_branch
    %51 = sbr.rel (0) target = $region57
  $region56: #{transformer_forward.1} parent=0 // pred_region
    _
  $region57: #{transformer_forward.1} parent=0 // pred_fallthru
    _
  // Predicated region
  $region58: #{transformer_forward.1} parent=0 // pred_check
    _
  $region59: #{transformer_forward.1} parent=0 // pred_check_branch
    %53 = sbr.rel (0) target = $region61
  $region60: #{transformer_forward.1} parent=0 // pred_region
    _
  $region61: #{transformer_forward.1} parent=0 // pred_fallthru
    _
  // Predicated region
  $region62: #{transformer_forward.1} parent=0 // pred_check
    _
  $region63: #{transformer_forward.1} parent=0 // pred_check_branch
    %55 = sbr.rel (0) target = $region65
  $region64: #{transformer_forward.1} parent=0 // pred_region
    _
  $region65: #{transformer_forward.1} parent=0 // pred_fallthru
    _
  // Predicated region
  $region66: #{transformer_forward.1} parent=0 // pred_check
    _
  $region67: #{transformer_forward.1} parent=0 // pred_check_branch
    %57 = sbr.rel (0) target = $region69
  $region68: #{transformer_forward.1} parent=0 // pred_region
    _
  $region69: #{transformer_forward.1} parent=0 // pred_fallthru
    _
  %v59 = vld [vmem:[%s0] sm:$0xff]
  %v60 = vld [vmem:[%s0 + $0x8] sm:$0xf]
  %v61 = vld [vmem:[%s2] sm:$0xf]
  %v62 = vld [vmem:[%s2 + $0x4] sm:$0x1]
  %v63 = vpack.c.bf16 %v60, %v59
  %v64 = vld [vmem:[%s3] sm:$0x1]
  %v66 = vlaneseq
  %v67 = vshrl.u32 %v66, 7
  %v68 = vsub.s32 0, %v67
  %v69 = vrot.slane %v64, %v68
  %v73 = vunpack.c.l.b16 %v61
  %v74 = vunpack.c.l.b16 %v62
  %v75 = vpack.c.b16 %v74, %v73
  %vm76 = vcmask 80896
  %v78 = vsel %vm76, %v63, 0
  %vm80 = vcmask 1044480
  %v82 = vsel %vm80, %v75, 0
  %84 = vmatprep.subr.bf16.mxu0 0
  %85 = vmatpush1.bf16.msra.mxu0 %v82
  %86 = vmatprep.subr.bf16.mxu0 0
  %87 = vmatpush1.bf16.msra.mxu0 0
  %88 = vmatprep.subr.bf16.mxu0 0
  %89 = vmatpush1.bf16.msra.mxu0 0
  %90 = vmatprep.subr.bf16.mxu0 0
  %91 = vmatpush1.bf16.msra.mxu0 0
  %92 = vmatprep.subr.bf16.mxu0 0
  %93 = vmatpush1.bf16.msra.mxu0 0
  %94 = vmatprep.subr.bf16.mxu0 0
  %95 = vmatpush1.bf16.msra.mxu0 0
  %96 = vmatprep.subr.bf16.mxu0 0
  %97 = vmatpush1.bf16.msra.mxu0 0
  %98 = vmatprep.subr.bf16.mxu0 0
  %99 = vmatpush1.bf16.msra.mxu0 0
  %100 = vmatprep.subr.bf16.mxu0 0
  %101 = vmatpush1.bf16.msra.mxu0 0
  %102 = vmatprep.subr.bf16.mxu0 0
  %103 = vmatpush1.bf16.msra.mxu0 0
  %104 = vmatprep.subr.bf16.mxu0 0
  %105 = vmatpush1.bf16.msra.mxu0 0
  %106 = vmatprep.subr.bf16.mxu0 0
  %107 = vmatpush1.bf16.msra.mxu0 0
  %108 = vmatprep.subr.bf16.mxu0 0
  %109 = vmatpush1.bf16.msra.mxu0 0
  %110 = vmatprep.subr.bf16.mxu0 0
  %111 = vmatpush1.bf16.msra.mxu0 0
  %112 = vmatprep.subr.bf16.mxu0 0
  %113 = vmatpush1.bf16.msra.mxu0 0
  %114 = vmatprep.subr.bf16.mxu0 0
  %115 = vmatpush1.bf16.msra.mxu0 0
  %116 = vmatprep.mubr.bf16.mxu0 0
  %117 = vmatmul.mubr.bf16.gmra.mrb[0].mxu0 %v78
  %v118 = vpop.f32.mrb[0].mxu0
  %v119 = vadd.f32 %v69, %v118
  %v120 = vpop.f32.mrb[0].mxu0
  %v121 = vpop.f32.mrb[0].mxu0
  %v122 = vadd.f32 %v69, %v121
  %v123 = vpop.f32.mrb[0].mxu0
  %124 = vdwg.mxu0
  %v125 = vld [vmem:[%s1] sm:$0x3]
  %s126 = scalar_lea.vmem %s1, 2
  %v127 = vld [vmem:[%s126] sm:$0x3]
  %v129 = vrot.slane %v125, 2
  %vm133 = vcmask 1041408
  %v134 = vrot.slane %v119, 6
  %v135 = vrot.slane %v122, 6
  %v136 = vsel %vm133, %v134, %v135
  %v139 = vrot.slane %v127, 2
  %vm141 = vcmask 1045504
  %v142 = vsel %vm141, %v119, %v129
  %v143 = vsel %vm141, %v136, %v139
  %vm144 = vcmask 261120
  %v145 = vsel %vm144, %v142, 0.0
  %v146 = vsel %vm144, %v143, 0.0
  %147 = vst [vmem:[%s18] sm:$0xff] %v145
  %148 = vst [vmem:[%s18 + $0x8] sm:$0xff] %v146
  %v149 = vld [vmem:[%s6] sm:$0xff]
  %v150 = vld [vmem:[%s6 + $0x8] sm:$0xff]
  %v151 = vld [vmem:[%s6 + $0x10] sm:$0xff]
  %v152 = vld [vmem:[%s6 + $0x18] sm:$0xff]
  %v153 = vpack.c.bf16 %v143, %v142
  %v158 = vunpack.c.l.b16 %v149
  %v159 = vunpack.c.h.b16 %v149
  %v160 = vunpack.c.l.b16 %v150
  %v161 = vunpack.c.h.b16 %v150
  %v162 = vunpack.c.l.b16 %v151
  %v163 = vunpack.c.h.b16 %v151
  %v164 = vunpack.c.l.b16 %v152
  %v165 = vunpack.c.h.b16 %v152
  %v166 = vpack.c.b16 %v160, %v158
  %v167 = vpack.c.b16 %v161, %v159
  %v168 = vpack.c.b16 %v164, %v162
  %v169 = vpack.c.b16 %v165, %v163
  %v175 = vsel %vm144, %v153, 0
  %177 = vmatprep.subr.bf16.mxu0 %v167
  %178 = vmatpush1.bf16.msra.mxu0 %v166
  %179 = vmatprep.subr.bf16.mxu0 %v169
  %180 = vmatpush1.bf16.msra.mxu0 %v168
  %181 = vmatprep.subr.bf16.mxu0 0
  %182 = vmatpush1.bf16.msra.mxu0 0
  %183 = vmatprep.subr.bf16.mxu0 0
  %184 = vmatpush1.bf16.msra.mxu0 0
  %185 = vmatprep.subr.bf16.mxu0 0
  %186 = vmatpush1.bf16.msra.mxu0 0
  %187 = vmatprep.subr.bf16.mxu0 0
  %188 = vmatpush1.bf16.msra.mxu0 0
  %189 = vmatprep.subr.bf16.mxu0 0
  %190 = vmatpush1.bf16.msra.mxu0 0
  %191 = vmatprep.subr.bf16.mxu0 0
  %192 = vmatpush1.bf16.msra.mxu0 0
  %193 = vmatprep.subr.bf16.mxu0 0
  %194 = vmatpush1.bf16.msra.mxu0 0
  %195 = vmatprep.subr.bf16.mxu0 0
  %196 = vmatpush1.bf16.msra.mxu0 0
  %197 = vmatprep.subr.bf16.mxu0 0
  %198 = vmatpush1.bf16.msra.mxu0 0
  %199 = vmatprep.subr.bf16.mxu0 0
  %200 = vmatpush1.bf16.msra.mxu0 0
  %201 = vmatprep.subr.bf16.mxu0 0
  %202 = vmatpush1.bf16.msra.mxu0 0
  %203 = vmatprep.subr.bf16.mxu0 0
  %204 = vmatpush1.bf16.msra.mxu0 0
  %205 = vmatprep.subr.bf16.mxu0 0
  %206 = vmatpush1.bf16.msra.mxu0 0
  %207 = vmatprep.subr.bf16.mxu0 0
  %208 = vmatpush1.bf16.msra.mxu0 0
  %209 = vmatprep.mubr.bf16.mxu0 0
  %210 = vmatmul.mubr.bf16.gmra.mrb[0].mxu0 %v175
  %v211 = vpop.f32.mrb[0].mxu0
  %v212 = vadd.f32 0.0, %v211
  %v213 = vpop.f32.mrb[0].mxu0
  %v214 = vadd.f32 0.0, %v213
  %v215 = vpop.f32.mrb[0].mxu0
  %v216 = vadd.f32 0.0, %v215
  %v217 = vpop.f32.mrb[0].mxu0
  %v218 = vadd.f32 0.0, %v217
  %219 = vdwg.mxu0
  %v220 = vpack.c.bf16 %v212, %v212
  %222 = vrot.lane.b32.xlu0 %v220, 64
  %v223 = vpop.permute.xlu0 %222
  %v225 = vsel %vm144, %v220, 0
  %v228 = vsel %vm144, %v223, 0
  %230 = vmatprep.subr.bf16.mxu0 0
  %231 = vmatpush1.bf16.xpose.msra.mxu0 %v228
  %232 = vmatprep.subr.bf16.mxu0 0
  %233 = vmatpush1.bf16.xpose.msra.mxu0 0
  %234 = vmatprep.subr.bf16.mxu0 0
  %235 = vmatpush1.bf16.xpose.msra.mxu0 0
  %236 = vmatprep.subr.bf16.mxu0 0
  %237 = vmatpush1.bf16.xpose.msra.mxu0 0
  %238 = vmatprep.subr.bf16.mxu0 0
  %239 = vmatpush1.bf16.xpose.msra.mxu0 0
  %240 = vmatprep.subr.bf16.mxu0 0
  %241 = vmatpush1.bf16.xpose.msra.mxu0 0
  %242 = vmatprep.subr.bf16.mxu0 0
  %243 = vmatpush1.bf16.xpose.msra.mxu0 0
  %244 = vmatprep.subr.bf16.mxu0 0
  %245 = vmatpush1.bf16.xpose.msra.mxu0 0
  %246 = vmatprep.subr.bf16.mxu0 0
  %247 = vmatpush1.bf16.xpose.msra.mxu0 0
  %248 = vmatprep.subr.bf16.mxu0 0
  %249 = vmatpush1.bf16.xpose.msra.mxu0 0
  %250 = vmatprep.subr.bf16.mxu0 0
  %251 = vmatpush1.bf16.xpose.msra.mxu0 0
  %252 = vmatprep.subr.bf16.mxu0 0
  %253 = vmatpush1.bf16.xpose.msra.mxu0 0
  %254 = vmatprep.subr.bf16.mxu0 0
  %255 = vmatpush1.bf16.xpose.msra.mxu0 0
  %256 = vmatprep.subr.bf16.mxu0 0
  %257 = vmatpush1.bf16.xpose.msra.mxu0 0
  %258 = vmatprep.subr.bf16.mxu0 0
  %259 = vmatpush1.bf16.xpose.msra.mxu0 0
  %260 = vmatprep.subr.bf16.mxu0 0
  %261 = vmatpush1.bf16.xpose.msra.mxu0 0
  %262 = vmatprep.mubr.bf16.mxu0 0
  %263 = vmatmul.mubr.bf16.gmra.mrb[0].mxu0 %v225
  %v264 = vpop.f32.mrb[0].mxu0
  %v265 = vadd.f32 0.0, %v264
  %v266 = vpop.f32.mrb[0].mxu0
  %v267 = vpop.f32.mrb[0].mxu0
  %v268 = vpop.f32.mrb[0].mxu0
  %269 = vdwg.mxu0
  %v270 = vmul.f32 %v265, 0.17677669
  %271 = vrot.lane.b32.xlu0 %v220, 96
  %v272 = vpop.permute.xlu0 %271
  %273 = vrot.lane.b32.xlu0 %v220, 32
  %v274 = vpop.permute.xlu0 %273
  %v276 = vsel %vm144, %v272, 0
  %v279 = vsel %vm144, %v274, 0
  %281 = vmatprep.subr.bf16.mxu0 0
  %282 = vmatpush1.bf16.xpose.msra.mxu0 %v279
  %283 = vmatprep.subr.bf16.mxu0 0
  %284 = vmatpush1.bf16.xpose.msra.mxu0 0
  %285 = vmatprep.subr.bf16.mxu0 0
  %286 = vmatpush1.bf16.xpose.msra.mxu0 0
  %287 = vmatprep.subr.bf16.mxu0 0
  %288 = vmatpush1.bf16.xpose.msra.mxu0 0
  %289 = vmatprep.subr.bf16.mxu0 0
  %290 = vmatpush1.bf16.xpose.msra.mxu0 0
  %291 = vmatprep.subr.bf16.mxu0 0
  %292 = vmatpush1.bf16.xpose.msra.mxu0 0
  %293 = vmatprep.subr.bf16.mxu0 0
  %294 = vmatpush1.bf16.xpose.msra.mxu0 0
  %295 = vmatprep.subr.bf16.mxu0 0
  %296 = vmatpush1.bf16.xpose.msra.mxu0 0
  %297 = vmatprep.subr.bf16.mxu0 0
  %298 = vmatpush1.bf16.xpose.msra.mxu0 0
  %299 = vmatprep.subr.bf16.mxu0 0
  %300 = vmatpush1.bf16.xpose.msra.mxu0 0
  %301 = vmatprep.subr.bf16.mxu0 0
  %302 = vmatpush1.bf16.xpose.msra.mxu0 0
  %303 = vmatprep.subr.bf16.mxu0 0
  %304 = vmatpush1.bf16.xpose.msra.mxu0 0
  %305 = vmatprep.subr.bf16.mxu0 0
  %306 = vmatpush1.bf16.xpose.msra.mxu0 0
  %307 = vmatprep.subr.bf16.mxu0 0
  %308 = vmatpush1.bf16.xpose.msra.mxu0 0
  %309 = vmatprep.subr.bf16.mxu0 0
  %310 = vmatpush1.bf16.xpose.msra.mxu0 0
  %311 = vmatprep.subr.bf16.mxu0 0
  %312 = vmatpush1.bf16.xpose.msra.mxu0 0
  %313 = vmatprep.mubr.bf16.mxu0 0
  %314 = vmatmul.mubr.bf16.gmra.mrb[0].mxu0 %v276
  %v315 = vpop.f32.mrb[0].mxu0
  %v316 = vadd.f32 0.0, %v315
  %v317 = vpop.f32.mrb[0].mxu0
  %v318 = vpop.f32.mrb[0].mxu0
  %v319 = vpop.f32.mrb[0].mxu0
  %320 = vdwg.mxu0
  %v321 = vmul.f32 %v316, 0.17677669
  %v322 = vpack.c.bf16 %v216, %v216
  %324 = vrot.lane.b32.xlu0 %v322, 64
  %v325 = vpop.permute.xlu0 %324
  %v327 = vsel %vm144, %v322, 0
  %v330 = vsel %vm144, %v325, 0
  %332 = vmatprep.subr.bf16.mxu0 0
  %333 = vmatpush1.bf16.xpose.msra.mxu0 %v330
  %334 = vmatprep.subr.bf16.mxu0 0
  %335 = vmatpush1.bf16.xpose.msra.mxu0 0
  %336 = vmatprep.subr.bf16.mxu0 0
  %337 = vmatpush1.bf16.xpose.msra.mxu0 0
  %338 = vmatprep.subr.bf16.mxu0 0
  %339 = vmatpush1.bf16.xpose.msra.mxu0 0
  %340 = vmatprep.subr.bf16.mxu0 0
  %341 = vmatpush1.bf16.xpose.msra.mxu0 0
  %342 = vmatprep.subr.bf16.mxu0 0
  %343 = vmatpush1.bf16.xpose.msra.mxu0 0
  %344 = vmatprep.subr.bf16.mxu0 0
  %345 = vmatpush1.bf16.xpose.msra.mxu0 0
  %346 = vmatprep.subr.bf16.mxu0 0
  %347 = vmatpush1.bf16.xpose.msra.mxu0 0
  %348 = vmatprep.subr.bf16.mxu0 0
  %349 = vmatpush1.bf16.xpose.msra.mxu0 0
  %350 = vmatprep.subr.bf16.mxu0 0
  %351 = vmatpush1.bf16.xpose.msra.mxu0 0
  %352 = vmatprep.subr.bf16.mxu0 0
  %353 = vmatpush1.bf16.xpose.msra.mxu0 0
  %354 = vmatprep.subr.bf16.mxu0 0
  %355 = vmatpush1.bf16.xpose.msra.mxu0 0
  %356 = vmatprep.subr.bf16.mxu0 0
  %357 = vmatpush1.bf16.xpose.msra.mxu0 0
  %358 = vmatprep.subr.bf16.mxu0 0
  %359 = vmatpush1.bf16.xpose.msra.mxu0 0
  %360 = vmatprep.subr.bf16.mxu0 0
  %361 = vmatpush1.bf16.xpose.msra.mxu0 0
  %362 = vmatprep.subr.bf16.mxu0 0
  %363 = vmatpush1.bf16.xpose.msra.mxu0 0
  %364 = vmatprep.mubr.bf16.mxu0 0
  %365 = vmatmul.mubr.bf16.gmra.mrb[0].mxu0 %v327
  %v366 = vpop.f32.mrb[0].mxu0
  %v367 = vadd.f32 0.0, %v366
  %v368 = vpop.f32.mrb[0].mxu0
  %v369 = vpop.f32.mrb[0].mxu0
  %v370 = vpop.f32.mrb[0].mxu0
  %371 = vdwg.mxu0
  %v372 = vmul.f32 %v367, 0.17677669
  %373 = vrot.lane.b32.xlu0 %v322, 96
  %v374 = vpop.permute.xlu0 %373
  %375 = vrot.lane.b32.xlu0 %v322, 32
  %v376 = vpop.permute.xlu0 %375
  %v378 = vsel %vm144, %v374, 0
  %v381 = vsel %vm144, %v376, 0
  %383 = vmatprep.subr.bf16.mxu0 0
  %384 = vmatpush1.bf16.xpose.msra.mxu0 %v381
  %385 = vmatprep.subr.bf16.mxu0 0
  %386 = vmatpush1.bf16.xpose.msra.mxu0 0
  %387 = vmatprep.subr.bf16.mxu0 0
  %388 = vmatpush1.bf16.xpose.msra.mxu0 0
  %389 = vmatprep.subr.bf16.mxu0 0
  %390 = vmatpush1.bf16.xpose.msra.mxu0 0
  %391 = vmatprep.subr.bf16.mxu0 0
  %392 = vmatpush1.bf16.xpose.msra.mxu0 0
  %393 = vmatprep.subr.bf16.mxu0 0
  %394 = vmatpush1.bf16.xpose.msra.mxu0 0
  %395 = vmatprep.subr.bf16.mxu0 0
  %396 = vmatpush1.bf16.xpose.msra.mxu0 0
  %397 = vmatprep.subr.bf16.mxu0 0
  %398 = vmatpush1.bf16.xpose.msra.mxu0 0
  %399 = vmatprep.subr.bf16.mxu0 0
  %400 = vmatpush1.bf16.xpose.msra.mxu0 0
  %401 = vmatprep.subr.bf16.mxu0 0
  %402 = vmatpush1.bf16.xpose.msra.mxu0 0
  %403 = vmatprep.subr.bf16.mxu0 0
  %404 = vmatpush1.bf16.xpose.msra.mxu0 0
  %405 = vmatprep.subr.bf16.mxu0 0
  %406 = vmatpush1.bf16.xpose.msra.mxu0 0
  %407 = vmatprep.subr.bf16.mxu0 0
  %408 = vmatpush1.bf16.xpose.msra.mxu0 0
  %409 = vmatprep.subr.bf16.mxu0 0
  %410 = vmatpush1.bf16.xpose.msra.mxu0 0
  %411 = vmatprep.subr.bf16.mxu0 0
  %412 = vmatpush1.bf16.xpose.msra.mxu0 0
  %413 = vmatprep.subr.bf16.mxu0 0
  %414 = vmatpush1.bf16.xpose.msra.mxu0 0
  %415 = vmatprep.mubr.bf16.mxu0 0
  %416 = vmatmul.mubr.bf16.gmra.mrb[0].mxu0 %v378
  %v417 = vpop.f32.mrb[0].mxu0
  %v418 = vadd.f32 0.0, %v417
  %v419 = vpop.f32.mrb[0].mxu0
  %v420 = vpop.f32.mrb[0].mxu0
  %v421 = vpop.f32.mrb[0].mxu0
  %422 = vdwg.mxu0
  %v423 = vmul.f32 %v418, 0.17677669
  %vm424 = vcmask 64512
  %v425 = vsel %vm424, %v270, -inf
  %426 = vmax.xlane.f32.xlu0 %v425
  %v427 = vpop.xlane.xlu0 %426
  %v428 = vsel %vm424, %v321, -inf
  %429 = vmax.xlane.f32.xlu0 %v428
  %v430 = vpop.xlane.xlu0 %429
  %v431 = vsel %vm424, %v372, -inf
  %432 = vmax.xlane.f32.xlu0 %v431
  %v433 = vpop.xlane.xlu0 %432
  %v434 = vsel %vm424, %v423, -inf
  %435 = vmax.xlane.f32.xlu0 %v434
  %v436 = vpop.xlane.xlu0 %435
  %v437 = vsub.f32 %v270, %v427
  %v438 = vsub.f32 %v321, %v430
  %v439 = vsub.f32 %v372, %v433
  %v440 = vsub.f32 %v423, %v436
  %v441 = vmul.f32 %v437, 1.442695
  %v442 = vpow.pop %v441
  %v443 = vmul.f32 %v438, 1.442695
  %v444 = vpow.pop %v443
  %v445 = vmul.f32 %v439, 1.442695
  %v446 = vpow.pop %v445
  %v447 = vmul.f32 %v440, 1.442695
  %v448 = vpow.pop %v447
  %v449 = vsel %vm424, %v442, 0.0
  %450 = vadd.xlane.f32.xlu0 %v449
  %v451 = vpop.xlane.xlu0 %450
  %v452 = vsel %vm424, %v444, 0.0
  %453 = vadd.xlane.f32.xlu0 %v452
  %v454 = vpop.xlane.xlu0 %453
  %v455 = vsel %vm424, %v446, 0.0
  %456 = vadd.xlane.f32.xlu0 %v455
  %v457 = vpop.xlane.xlu0 %456
  %v458 = vsel %vm424, %v448, 0.0
  %459 = vadd.xlane.f32.xlu0 %v458
  %v460 = vpop.xlane.xlu0 %459
  %v461 = vrcp.pop %v451
  %v462 = vrcp.pop %v454
  %v463 = vrcp.pop %v457
  %v464 = vrcp.pop %v460
  %v465 = vmul.f32 %v442, %v461
  %v466 = vmul.f32 %v444, %v462
  %v467 = vmul.f32 %v446, %v463
  %v468 = vmul.f32 %v448, %v464
  %v469 = vpack.c.bf16 %v465, %v465
  %v470 = vpack.c.bf16 %v214, %v214
  %v472 = vsel %vm424, %v469, 0
  %vm474 = vcmask 1043456
  %v476 = vsel %vm474, %v470, 0
  %478 = vmatprep.subr.bf16.mxu0 0
  %479 = vmatpush1.bf16.msra.mxu0 %v476
  %480 = vmatprep.subr.bf16.mxu0 0
  %481 = vmatpush1.bf16.msra.mxu0 0
  %482 = vmatprep.subr.bf16.mxu0 0
  %483 = vmatpush1.bf16.msra.mxu0 0
  %484 = vmatprep.subr.bf16.mxu0 0
  %485 = vmatpush1.bf16.msra.mxu0 0
  %486 = vmatprep.subr.bf16.mxu0 0
  %487 = vmatpush1.bf16.msra.mxu0 0
  %488 = vmatprep.subr.bf16.mxu0 0
  %489 = vmatpush1.bf16.msra.mxu0 0
  %490 = vmatprep.subr.bf16.mxu0 0
  %491 = vmatpush1.bf16.msra.mxu0 0
  %492 = vmatprep.subr.bf16.mxu0 0
  %493 = vmatpush1.bf16.msra.mxu0 0
  %494 = vmatprep.subr.bf16.mxu0 0
  %495 = vmatpush1.bf16.msra.mxu0 0
  %496 = vmatprep.subr.bf16.mxu0 0
  %497 = vmatpush1.bf16.msra.mxu0 0
  %498 = vmatprep.subr.bf16.mxu0 0
  %499 = vmatpush1.bf16.msra.mxu0 0
  %500 = vmatprep.subr.bf16.mxu0 0
  %501 = vmatpush1.bf16.msra.mxu0 0
  %502 = vmatprep.subr.bf16.mxu0 0
  %503 = vmatpush1.bf16.msra.mxu0 0
  %504 = vmatprep.subr.bf16.mxu0 0
  %505 = vmatpush1.bf16.msra.mxu0 0
  %506 = vmatprep.subr.bf16.mxu0 0
  %507 = vmatpush1.bf16.msra.mxu0 0
  %508 = vmatprep.subr.bf16.mxu0 0
  %509 = vmatpush1.bf16.msra.mxu0 0
  %510 = vmatprep.mubr.bf16.mxu0 0
  %511 = vmatmul.mubr.bf16.gmra.mrb[0].mxu0 %v472
  %v512 = vpop.f32.mrb[0].mxu0
  %v513 = vadd.f32 0.0, %v512
  %v514 = vpop.f32.mrb[0].mxu0
  %v515 = vpop.f32.mrb[0].mxu0
  %v516 = vpop.f32.mrb[0].mxu0
  %517 = vdwg.mxu0
  %v518 = vpack.c.bf16 %v466, %v466
  %520 = vrot.lane.b32.xlu0 %v470, 96
  %v521 = vpop.permute.xlu0 %520
  %v523 = vsel %vm424, %v518, 0
  %v526 = vsel %vm474, %v521, 0
  %528 = vmatprep.subr.bf16.mxu0 0
  %529 = vmatpush1.bf16.msra.mxu0 %v526
  %530 = vmatprep.subr.bf16.mxu0 0
  %531 = vmatpush1.bf16.msra.mxu0 0
  %532 = vmatprep.subr.bf16.mxu0 0
  %533 = vmatpush1.bf16.msra.mxu0 0
  %534 = vmatprep.subr.bf16.mxu0 0
  %535 = vmatpush1.bf16.msra.mxu0 0
  %536 = vmatprep.subr.bf16.mxu0 0
  %537 = vmatpush1.bf16.msra.mxu0 0
  %538 = vmatprep.subr.bf16.mxu0 0
  %539 = vmatpush1.bf16.msra.mxu0 0
  %540 = vmatprep.subr.bf16.mxu0 0
  %541 = vmatpush1.bf16.msra.mxu0 0
  %542 = vmatprep.subr.bf16.mxu0 0
  %543 = vmatpush1.bf16.msra.mxu0 0
  %544 = vmatprep.subr.bf16.mxu0 0
  %545 = vmatpush1.bf16.msra.mxu0 0
  %546 = vmatprep.subr.bf16.mxu0 0
  %547 = vmatpush1.bf16.msra.mxu0 0
  %548 = vmatprep.subr.bf16.mxu0 0
  %549 = vmatpush1.bf16.msra.mxu0 0
  %550 = vmatprep.subr.bf16.mxu0 0
  %551 = vmatpush1.bf16.msra.mxu0 0
  %552 = vmatprep.subr.bf16.mxu0 0
  %553 = vmatpush1.bf16.msra.mxu0 0
  %554 = vmatprep.subr.bf16.mxu0 0
  %555 = vmatpush1.bf16.msra.mxu0 0
  %556 = vmatprep.subr.bf16.mxu0 0
  %557 = vmatpush1.bf16.msra.mxu0 0
  %558 = vmatprep.subr.bf16.mxu0 0
  %559 = vmatpush1.bf16.msra.mxu0 0
  %560 = vmatprep.mubr.bf16.mxu0 0
  %561 = vmatmul.mubr.bf16.gmra.mrb[0].mxu0 %v523
  %v562 = vpop.f32.mrb[0].mxu0
  %v563 = vadd.f32 0.0, %v562
  %v564 = vpop.f32.mrb[0].mxu0
  %v565 = vpop.f32.mrb[0].mxu0
  %v566 = vpop.f32.mrb[0].mxu0
  %567 = vdwg.mxu0
  %569 = vrot.lane.b32.xlu0 %v563, 32
  %v570 = vpop.permute.xlu0 %569
  %v572 = vsel %vm144, %v513, %v570
  %v573 = vpack.c.bf16 %v467, %v467
  %v574 = vpack.c.bf16 %v218, %v218
  %v576 = vsel %vm424, %v573, 0
  %v579 = vsel %vm474, %v574, 0
  %581 = vmatprep.subr.bf16.mxu0 0
  %582 = vmatpush1.bf16.msra.mxu0 %v579
  %583 = vmatprep.subr.bf16.mxu0 0
  %584 = vmatpush1.bf16.msra.mxu0 0
  %585 = vmatprep.subr.bf16.mxu0 0
  %586 = vmatpush1.bf16.msra.mxu0 0
  %587 = vmatprep.subr.bf16.mxu0 0
  %588 = vmatpush1.bf16.msra.mxu0 0
  %589 = vmatprep.subr.bf16.mxu0 0
  %590 = vmatpush1.bf16.msra.mxu0 0
  %591 = vmatprep.subr.bf16.mxu0 0
  %592 = vmatpush1.bf16.msra.mxu0 0
  %593 = vmatprep.subr.bf16.mxu0 0
  %594 = vmatpush1.bf16.msra.mxu0 0
  %595 = vmatprep.subr.bf16.mxu0 0
  %596 = vmatpush1.bf16.msra.mxu0 0
  %597 = vmatprep.subr.bf16.mxu0 0
  %598 = vmatpush1.bf16.msra.mxu0 0
  %599 = vmatprep.subr.bf16.mxu0 0
  %600 = vmatpush1.bf16.msra.mxu0 0
  %601 = vmatprep.subr.bf16.mxu0 0
  %602 = vmatpush1.bf16.msra.mxu0 0
  %603 = vmatprep.subr.bf16.mxu0 0
  %604 = vmatpush1.bf16.msra.mxu0 0
  %605 = vmatprep.subr.bf16.mxu0 0
  %606 = vmatpush1.bf16.msra.mxu0 0
  %607 = vmatprep.subr.bf16.mxu0 0
  %608 = vmatpush1.bf16.msra.mxu0 0
  %609 = vmatprep.subr.bf16.mxu0 0
  %610 = vmatpush1.bf16.msra.mxu0 0
  %611 = vmatprep.subr.bf16.mxu0 0
  %612 = vmatpush1.bf16.msra.mxu0 0
  %613 = vmatprep.mubr.bf16.mxu0 0
  %614 = vmatmul.mubr.bf16.gmra.mrb[0].mxu0 %v576
  %v615 = vpop.f32.mrb[0].mxu0
  %v616 = vadd.f32 0.0, %v615
  %v617 = vpop.f32.mrb[0].mxu0
  %v618 = vpop.f32.mrb[0].mxu0
  %v619 = vpop.f32.mrb[0].mxu0
  %620 = vdwg.mxu0
  %v621 = vpack.c.bf16 %v468, %v468
  %623 = vrot.lane.b32.xlu0 %v574, 96
  %v624 = vpop.permute.xlu0 %623
  %v626 = vsel %vm424, %v621, 0
  %v629 = vsel %vm474, %v624, 0
  %631 = vmatprep.subr.bf16.mxu0 0
  %632 = vmatpush1.bf16.msra.mxu0 %v629
  %633 = vmatprep.subr.bf16.mxu0 0
  %634 = vmatpush1.bf16.msra.mxu0 0
  %635 = vmatprep.subr.bf16.mxu0 0
  %636 = vmatpush1.bf16.msra.mxu0 0
  %637 = vmatprep.subr.bf16.mxu0 0
  %638 = vmatpush1.bf16.msra.mxu0 0
  %639 = vmatprep.subr.bf16.mxu0 0
  %640 = vmatpush1.bf16.msra.mxu0 0
  %641 = vmatprep.subr.bf16.mxu0 0
  %642 = vmatpush1.bf16.msra.mxu0 0
  %643 = vmatprep.subr.bf16.mxu0 0
  %644 = vmatpush1.bf16.msra.mxu0 0
  %645 = vmatprep.subr.bf16.mxu0 0
  %646 = vmatpush1.bf16.msra.mxu0 0
  %647 = vmatprep.subr.bf16.mxu0 0
  %648 = vmatpush1.bf16.msra.mxu0 0
  %649 = vmatprep.subr.bf16.mxu0 0
  %650 = vmatpush1.bf16.msra.mxu0 0
  %651 = vmatprep.subr.bf16.mxu0 0
  %652 = vmatpush1.bf16.msra.mxu0 0
  %653 = vmatprep.subr.bf16.mxu0 0
  %654 = vmatpush1.bf16.msra.mxu0 0
  %655 = vmatprep.subr.bf16.mxu0 0
  %656 = vmatpush1.bf16.msra.mxu0 0
  %657 = vmatprep.subr.bf16.mxu0 0
  %658 = vmatpush1.bf16.msra.mxu0 0
  %659 = vmatprep.subr.bf16.mxu0 0
  %660 = vmatpush1.bf16.msra.mxu0 0
  %661 = vmatprep.subr.bf16.mxu0 0
  %662 = vmatpush1.bf16.msra.mxu0 0
  %663 = vmatprep.mubr.bf16.mxu0 0
  %664 = vmatmul.mubr.bf16.gmra.mrb[0].mxu0 %v626
  %v665 = vpop.f32.mrb[0].mxu0
  %v666 = vadd.f32 0.0, %v665
  %v667 = vpop.f32.mrb[0].mxu0
  %v668 = vpop.f32.mrb[0].mxu0
  %v669 = vpop.f32.mrb[0].mxu0
  %670 = vdwg.mxu0
  %672 = vrot.lane.b32.xlu0 %v666, 32
  %v673 = vpop.permute.xlu0 %672
  %v675 = vsel %vm144, %v616, %v673
  %v676 = vld [vmem:[%s7] sm:$0xf]
  %v677 = vld [vmem:[%s7 + $0x4] sm:$0xf]
  %v678 = vld [vmem:[%s7 + $0x8] sm:$0xf]
  %v679 = vld [vmem:[%s7 + $0xc] sm:$0xf]
  %v680 = vld [vmem:[%s7 + $0x10] sm:$0xf]
  %v681 = vld [vmem:[%s7 + $0x14] sm:$0xf]
  %v682 = vld [vmem:[%s7 + $0x18] sm:$0xf]
  %v683 = vld [vmem:[%s7 + $0x1c] sm:$0xf]
  %v684 = vpack.c.bf16 %v675, %v572
  %v685 = vld [vmem:[%s8] sm:$0x1]
  %v687 = vlaneseq
  %v688 = vshrl.u32 %v687, 7
  %v689 = vsub.s32 0, %v688
  %v690 = vrot.slane %v685, %v689
  %v700 = vunpack.c.l.b16 %v676
  %v701 = vunpack.c.l.b16 %v677
  %v702 = vunpack.c.l.b16 %v678
  %v703 = vunpack.c.l.b16 %v679
  %v704 = vunpack.c.l.b16 %v680
  %v705 = vunpack.c.l.b16 %v681
  %v706 = vunpack.c.l.b16 %v682
  %v707 = vunpack.c.l.b16 %v683
  %v708 = vpack.c.b16 %v701, %v700
  %v709 = vpack.c.b16 %v703, %v702
  %v710 = vpack.c.b16 %v705, %v704
  %v711 = vpack.c.b16 %v707, %v706
  %vm716 = vcmask 523264
  %v718 = vsel %vm716, %v684, 0
  %720 = vmatprep.subr.bf16.mxu0 0
  %721 = vmatpush1.bf16.msra.mxu0 %v708
  %722 = vmatprep.subr.bf16.mxu0 0
  %723 = vmatpush1.bf16.msra.mxu0 %v709
  %724 = vmatprep.subr.bf16.mxu0 0
  %725 = vmatpush1.bf16.msra.mxu0 %v710
  %726 = vmatprep.subr.bf16.mxu0 0
  %727 = vmatpush1.bf16.msra.mxu0 %v711
  %728 = vmatprep.subr.bf16.mxu0 0
  %729 = vmatpush1.bf16.msra.mxu0 0
  %730 = vmatprep.subr.bf16.mxu0 0
  %731 = vmatpush1.bf16.msra.mxu0 0
  %732 = vmatprep.subr.bf16.mxu0 0
  %733 = vmatpush1.bf16.msra.mxu0 0
  %734 = vmatprep.subr.bf16.mxu0 0
  %735 = vmatpush1.bf16.msra.mxu0 0
  %736 = vmatprep.subr.bf16.mxu0 0
  %737 = vmatpush1.bf16.msra.mxu0 0
  %738 = vmatprep.subr.bf16.mxu0 0
  %739 = vmatpush1.bf16.msra.mxu0 0
  %740 = vmatprep.subr.bf16.mxu0 0
  %741 = vmatpush1.bf16.msra.mxu0 0
  %742 = vmatprep.subr.bf16.mxu0 0
  %743 = vmatpush1.bf16.msra.mxu0 0
  %744 = vmatprep.subr.bf16.mxu0 0
  %745 = vmatpush1.bf16.msra.mxu0 0
  %746 = vmatprep.subr.bf16.mxu0 0
  %747 = vmatpush1.bf16.msra.mxu0 0
  %748 = vmatprep.subr.bf16.mxu0 0
  %749 = vmatpush1.bf16.msra.mxu0 0
  %750 = vmatprep.subr.bf16.mxu0 0
  %751 = vmatpush1.bf16.msra.mxu0 0
  %752 = vmatprep.mubr.bf16.mxu0 0
  %753 = vmatmul.mubr.bf16.gmra.mrb[0].mxu0 %v718
  %v754 = vpop.f32.mrb[0].mxu0
  %v755 = vadd.f32 %v690, %v754
  %v756 = vpop.f32.mrb[0].mxu0
  %v757 = vpop.f32.mrb[0].mxu0
  %v758 = vadd.f32 %v690, %v757
  %v759 = vpop.f32.mrb[0].mxu0
  %760 = vdwg.mxu0
  %v761 = vadd.f32 %v755, %v142
  %v762 = vadd.f32 %v758, %v143
  %v763 = vld [vmem:[%s9] sm:$0x1]
  %v764 = vld [vmem:[%s10] sm:$0x1]
  %v765 = vsel %vm144, %v761, 0.0
  %766 = vadd.xlane.f32.xlu0 %v765
  %v767 = vpop.xlane.xlu0 %766
  %v768 = vsel %vm144, %v762, 0.0
  %769 = vadd.xlane.f32.xlu0 %v768
  %v770 = vpop.xlane.xlu0 %769
  %v771 = vrcp.pop 32.0
  %v772 = vmul.f32 %v767, %v771
  %v773 = vmul.f32 %v770, %v771
  %v774 = vsub.f32 %v761, %v772
  %v775 = vsub.f32 %v762, %v773
  %v776 = vmul.f32 %v774, %v774
  %v777 = vmul.f32 %v775, %v775
  %v778 = vsel %vm144, %v776, 0.0
  %779 = vadd.xlane.f32.xlu0 %v778
  %v780 = vpop.xlane.xlu0 %779
  %v781 = vsel %vm144, %v777, 0.0
  %782 = vadd.xlane.f32.xlu0 %v781
  %v783 = vpop.xlane.xlu0 %782
  %v784 = vmul.f32 %v780, %v771
  %v785 = vmul.f32 %v783, %v771
  %v786 = vadd.f32 %v784, 1e-05
  %v787 = vadd.f32 %v785, 1e-05
  %v788 = vrsqrt.pop %v786
  %v789 = vrsqrt.pop %v787
  %v790 = vmul.f32 %v774, %v788
  %v791 = vmul.f32 %v775, %v789
  %v793 = vlaneseq
  %v794 = vshrl.u32 %v793, 7
  %v795 = vsub.s32 0, %v794
  %v796 = vrot.slane %v763, %v795
  %v798 = vmul.f32 %v790, %v796
  %v799 = vmul.f32 %v791, %v796
  %v801 = vlaneseq
  %v802 = vshrl.u32 %v801, 7
  %v803 = vsub.s32 0, %v802
  %v804 = vrot.slane %v764, %v803
  %v806 = vadd.f32 %v798, %v804
  %v807 = vadd.f32 %v799, %v804
  %v808 = vld [vmem:[%s11] sm:$0xf]
  %v809 = vld [vmem:[%s11 + $0x4] sm:$0xf]
  %v810 = vld [vmem:[%s11 + $0x8] sm:$0xf]
  %v811 = vld [vmem:[%s11 + $0xc] sm:$0xf]
  %v812 = vpack.c.bf16 %v807, %v806
  %v813 = vld [vmem:[%s12] sm:$0x1]
  %v815 = vlaneseq
  %v816 = vshrl.u32 %v815, 7
  %v817 = vsub.s32 0, %v816
  %v818 = vrot.slane %v813, %v817
  %v824 = vunpack.c.l.b16 %v808
  %v825 = vunpack.c.l.b16 %v809
  %v826 = vunpack.c.l.b16 %v810
  %v827 = vunpack.c.l.b16 %v811
  %v828 = vpack.c.b16 %v825, %v824
  %v829 = vpack.c.b16 %v827, %v826
  %v833 = vsel %vm144, %v812, 0
  %835 = vmatprep.subr.bf16.mxu0 0
  %836 = vmatpush1.bf16.msra.mxu0 %v828
  %837 = vmatprep.subr.bf16.mxu0 0
  %838 = vmatpush1.bf16.msra.mxu0 %v829
  %839 = vmatprep.subr.bf16.mxu0 0
  %840 = vmatpush1.bf16.msra.mxu0 0
  %841 = vmatprep.subr.bf16.mxu0 0
  %842 = vmatpush1.bf16.msra.mxu0 0
  %843 = vmatprep.subr.bf16.mxu0 0
  %844 = vmatpush1.bf16.msra.mxu0 0
  %845 = vmatprep.subr.bf16.mxu0 0
  %846 = vmatpush1.bf16.msra.mxu0 0
  %847 = vmatprep.subr.bf16.mxu0 0
  %848 = vmatpush1.bf16.msra.mxu0 0
  %849 = vmatprep.subr.bf16.mxu0 0
  %850 = vmatpush1.bf16.msra.mxu0 0
  %851 = vmatprep.subr.bf16.mxu0 0
  %852 = vmatpush1.bf16.msra.mxu0 0
  %853 = vmatprep.subr.bf16.mxu0 0
  %854 = vmatpush1.bf16.msra.mxu0 0
  %855 = vmatprep.subr.bf16.mxu0 0
  %856 = vmatpush1.bf16.msra.mxu0 0
  %857 = vmatprep.subr.bf16.mxu0 0
  %858 = vmatpush1.bf16.msra.mxu0 0
  %859 = vmatprep.subr.bf16.mxu0 0
  %860 = vmatpush1.bf16.msra.mxu0 0
  %861 = vmatprep.subr.bf16.mxu0 0
  %862 = vmatpush1.bf16.msra.mxu0 0
  %863 = vmatprep.subr.bf16.mxu0 0
  %864 = vmatpush1.bf16.msra.mxu0 0
  %865 = vmatprep.subr.bf16.mxu0 0
  %866 = vmatpush1.bf16.msra.mxu0 0
  %867 = vmatprep.mubr.bf16.mxu0 0
  %868 = vmatmul.mubr.bf16.gmra.mrb[0].mxu0 %v833
  %v869 = vpop.f32.mrb[0].mxu0
  %v870 = vadd.f32 %v818, %v869
  %v871 = vpop.f32.mrb[0].mxu0
  %v872 = vpop.f32.mrb[0].mxu0
  %v873 = vadd.f32 %v818, %v872
  %v874 = vpop.f32.mrb[0].mxu0
  %875 = vdwg.mxu0
  %v876 = vmax.f32 %v870, 0.0
  %v877 = vmax.f32 %v873, 0.0
  %v878 = vld [vmem:[%s13] sm:$0xf]
  %v879 = vld [vmem:[%s13 + $0x4] sm:$0xf]
  %v880 = vld [vmem:[%s13 + $0x8] sm:$0xf]
  %v881 = vld [vmem:[%s13 + $0xc] sm:$0xf]
  %v882 = vld [vmem:[%s13 + $0x10] sm:$0xf]
  %v883 = vld [vmem:[%s13 + $0x14] sm:$0xf]
  %v884 = vld [vmem:[%s13 + $0x18] sm:$0xf]
  %v885 = vld [vmem:[%s13 + $0x1c] sm:$0xf]
  %v886 = vld [vmem:[%s13 + $0x20] sm:$0xf]
  %v887 = vld [vmem:[%s13 + $0x24] sm:$0xf]
  %v888 = vld [vmem:[%s13 + $0x28] sm:$0xf]
  %v889 = vld [vmem:[%s13 + $0x2c] sm:$0xf]
  %v890 = vld [vmem:[%s13 + $0x30] sm:$0xf]
  %v891 = vld [vmem:[%s13 + $0x34] sm:$0xf]
  %v892 = vld [vmem:[%s13 + $0x38] sm:$0xf]
  %v893 = vld [vmem:[%s13 + $0x3c] sm:$0xf]
  %v894 = vpack.c.bf16 %v877, %v876
  %v895 = vld [vmem:[%s14] sm:$0x1]
  %v897 = vlaneseq
  %v898 = vshrl.u32 %v897, 7
  %v899 = vsub.s32 0, %v898
  %v900 = vrot.slane %v895, %v899
  %v918 = vunpack.c.l.b16 %v878
  %v919 = vunpack.c.l.b16 %v879
  %v920 = vunpack.c.l.b16 %v880
  %v921 = vunpack.c.l.b16 %v881
  %v922 = vunpack.c.l.b16 %v882
  %v923 = vunpack.c.l.b16 %v883
  %v924 = vunpack.c.l.b16 %v884
  %v925 = vunpack.c.l.b16 %v885
  %v926 = vunpack.c.l.b16 %v886
  %v927 = vunpack.c.l.b16 %v887
  %v928 = vunpack.c.l.b16 %v888
  %v929 = vunpack.c.l.b16 %v889
  %v930 = vunpack.c.l.b16 %v890
  %v931 = vunpack.c.l.b16 %v891
  %v932 = vunpack.c.l.b16 %v892
  %v933 = vunpack.c.l.b16 %v893
  %v934 = vpack.c.b16 %v919, %v918
  %v935 = vpack.c.b16 %v921, %v920
  %v936 = vpack.c.b16 %v923, %v922
  %v937 = vpack.c.b16 %v925, %v924
  %v938 = vpack.c.b16 %v927, %v926
  %v939 = vpack.c.b16 %v929, %v928
  %v940 = vpack.c.b16 %v931, %v930
  %v941 = vpack.c.b16 %v933, %v932
  %950 = vmatprep.subr.bf16.mxu0 0
  %951 = vmatpush1.bf16.msra.mxu0 %v934
  %952 = vmatprep.subr.bf16.mxu0 0
  %953 = vmatpush1.bf16.msra.mxu0 %v935
  %954 = vmatprep.subr.bf16.mxu0 0
  %955 = vmatpush1.bf16.msra.mxu0 %v936
  %956 = vmatprep.subr.bf16.mxu0 0
  %957 = vmatpush1.bf16.msra.mxu0 %v937
  %958 = vmatprep.subr.bf16.mxu0 0
  %959 = vmatpush1.bf16.msra.mxu0 %v938
  %960 = vmatprep.subr.bf16.mxu0 0
  %961 = vmatpush1.bf16.msra.mxu0 %v939
  %962 = vmatprep.subr.bf16.mxu0 0
  %963 = vmatpush1.bf16.msra.mxu0 %v940
  %964 = vmatprep.subr.bf16.mxu0 0
  %965 = vmatpush1.bf16.msra.mxu0 %v941
  %966 = vmatprep.subr.bf16.mxu0 0
  %967 = vmatpush1.bf16.msra.mxu0 0
  %968 = vmatprep.subr.bf16.mxu0 0
  %969 = vmatpush1.bf16.msra.mxu0 0
  %970 = vmatprep.subr.bf16.mxu0 0
  %971 = vmatpush1.bf16.msra.mxu0 0
  %972 = vmatprep.subr.bf16.mxu0 0
  %973 = vmatpush1.bf16.msra.mxu0 0
  %974 = vmatprep.subr.bf16.mxu0 0
  %975 = vmatpush1.bf16.msra.mxu0 0
  %976 = vmatprep.subr.bf16.mxu0 0
  %977 = vmatpush1.bf16.msra.mxu0 0
  %978 = vmatprep.subr.bf16.mxu0 0
  %979 = vmatpush1.bf16.msra.mxu0 0
  %980 = vmatprep.subr.bf16.mxu0 0
  %981 = vmatpush1.bf16.msra.mxu0 0
  %982 = vmatprep.mubr.bf16.mxu0 0
  %983 = vmatmul.mubr.bf16.gmra.mrb[0].mxu0 %v894
  %v984 = vpop.f32.mrb[0].mxu0
  %v985 = vadd.f32 %v900, %v984
  %v986 = vpop.f32.mrb[0].mxu0
  %v987 = vpop.f32.mrb[0].mxu0
  %v988 = vadd.f32 %v900, %v987
  %v989 = vpop.f32.mrb[0].mxu0
  %990 = vdwg.mxu0
  %v991 = vadd.f32 %v985, %v806
  %v992 = vadd.f32 %v988, %v807
  %v993 = vld [vmem:[%s15] sm:$0x1]
  %v994 = vld [vmem:[%s16] sm:$0x1]
  %v995 = vsel %vm144, %v991, 0.0
  %996 = vadd.xlane.f32.xlu0 %v995
  %v997 = vpop.xlane.xlu0 %996
  %v998 = vsel %vm144, %v992, 0.0
  %999 = vadd.xlane.f32.xlu0 %v998
  %v1000 = vpop.xlane.xlu0 %999
  %v1001 = vmul.f32 %v997, %v771
  %v1002 = vmul.f32 %v1000, %v771
  %v1003 = vsub.f32 %v991, %v1001
  %v1004 = vsub.f32 %v992, %v1002
  %v1005 = vmul.f32 %v1003, %v1003
  %v1006 = vmul.f32 %v1004, %v1004
  %v1007 = vsel %vm144, %v1005, 0.0
  %1008 = vadd.xlane.f32.xlu0 %v1007
  %v1009 = vpop.xlane.xlu0 %1008
  %v1010 = vsel %vm144, %v1006, 0.0
  %1011 = vadd.xlane.f32.xlu0 %v1010
  %v1012 = vpop.xlane.xlu0 %1011
  %v1013 = vmul.f32 %v1009, %v771
  %v1014 = vmul.f32 %v1012, %v771
  %v1015 = vadd.f32 %v1013, 1e-05
  %v1016 = vadd.f32 %v1014, 1e-05
  %v1017 = vrsqrt.pop %v1015
  %v1018 = vrsqrt.pop %v1016
  %v1019 = vmul.f32 %v1003, %v1017
  %v1020 = vmul.f32 %v1004, %v1018
  %v1022 = vlaneseq
  %v1023 = vshrl.u32 %v1022, 7
  %v1024 = vsub.s32 0, %v1023
  %v1025 = vrot.slane %v993, %v1024
  %v1027 = vmul.f32 %v1019, %v1025
  %v1028 = vmul.f32 %v1020, %v1025
  %v1030 = vlaneseq
  %v1031 = vshrl.u32 %v1030, 7
  %v1032 = vsub.s32 0, %v1031
  %v1033 = vrot.slane %v994, %v1032
  %v1035 = vadd.f32 %v1027, %v1033
  %v1036 = vadd.f32 %v1028, %v1033
  %s1037 = scalar_lea.vmem %s6, 32
  %v1038 = vld [vmem:[%s1037] sm:$0xff]
  %v1039 = vld [vmem:[%s1037 + $0x8] sm:$0xff]
  %v1040 = vld [vmem:[%s1037 + $0x10] sm:$0xff]
  %v1041 = vld [vmem:[%s1037 + $0x18] sm:$0xff]
  %v1042 = vpack.c.bf16 %v1036, %v1035
  %v1047 = vunpack.c.l.b16 %v1038
  %v1048 = vunpack.c.h.b16 %v1038
  %v1049 = vunpack.c.l.b16 %v1039
  %v1050 = vunpack.c.h.b16 %v1039
  %v1051 = vunpack.c.l.b16 %v1040
  %v1052 = vunpack.c.h.b16 %v1040
  %v1053 = vunpack.c.l.b16 %v1041
  %v1054 = vunpack.c.h.b16 %v1041
  %v1055 = vpack.c.b16 %v1049, %v1047
  %v1056 = vpack.c.b16 %v1050, %v1048
  %v1057 = vpack.c.b16 %v1053, %v1051
  %v1058 = vpack.c.b16 %v1054, %v1052
  %v1064 = vsel %vm144, %v1042, 0
  %1066 = vmatprep.subr.bf16.mxu0 %v1056
  %1067 = vmatpush1.bf16.msra.mxu0 %v1055
  %1068 = vmatprep.subr.bf16.mxu0 %v1058
  %1069 = vmatpush1.bf16.msra.mxu0 %v1057
  %1070 = vmatprep.subr.bf16.mxu0 0
  %1071 = vmatpush1.bf16.msra.mxu0 0
  %1072 = vmatprep.subr.bf16.mxu0 0
  %1073 = vmatpush1.bf16.msra.mxu0 0
  %1074 = vmatprep.subr.bf16.mxu0 0
  %1075 = vmatpush1.bf16.msra.mxu0 0
  %1076 = vmatprep.subr.bf16.mxu0 0
  %1077 = vmatpush1.bf16.msra.mxu0 0
  %1078 = vmatprep.subr.bf16.mxu0 0
  %1079 = vmatpush1.bf16.msra.mxu0 0
  %1080 = vmatprep.subr.bf16.mxu0 0
  %1081 = vmatpush1.bf16.msra.mxu0 0
  %1082 = vmatprep.subr.bf16.mxu0 0
  %1083 = vmatpush1.bf16.msra.mxu0 0
  %1084 = vmatprep.subr.bf16.mxu0 0
  %1085 = vmatpush1.bf16.msra.mxu0 0
  %1086 = vmatprep.subr.bf16.mxu0 0
  %1087 = vmatpush1.bf16.msra.mxu0 0
  %1088 = vmatprep.subr.bf16.mxu0 0
  %1089 = vmatpush1.bf16.msra.mxu0 0
  %1090 = vmatprep.subr.bf16.mxu0 0
  %1091 = vmatpush1.bf16.msra.mxu0 0
  %1092 = vmatprep.subr.bf16.mxu0 0
  %1093 = vmatpush1.bf16.msra.mxu0 0
  %1094 = vmatprep.subr.bf16.mxu0 0
  %1095 = vmatpush1.bf16.msra.mxu0 0
  %1096 = vmatprep.subr.bf16.mxu0 0
  %1097 = vmatpush1.bf16.msra.mxu0 0
  %1098 = vmatprep.mubr.bf16.mxu0 0
  %1099 = vmatmul.mubr.bf16.gmra.mrb[0].mxu0 %v1064
  %v1100 = vpop.f32.mrb[0].mxu0
  %v1101 = vadd.f32 0.0, %v1100
  %v1102 = vpop.f32.mrb[0].mxu0
  %v1103 = vadd.f32 0.0, %v1102
  %v1104 = vpop.f32.mrb[0].mxu0
  %v1105 = vadd.f32 0.0, %v1104
  %v1106 = vpop.f32.mrb[0].mxu0
  %v1107 = vadd.f32 0.0, %v1106
  %1108 = vdwg.mxu0
  %v1109 = vpack.c.bf16 %v1101, %v1101
  %1111 = vrot.lane.b32.xlu0 %v1109, 64
  %v1112 = vpop.permute.xlu0 %1111
  %v1114 = vsel %vm144, %v1109, 0
  %v1117 = vsel %vm144, %v1112, 0
  %1119 = vmatprep.subr.bf16.mxu0 0
  %1120 = vmatpush1.bf16.xpose.msra.mxu0 %v1117
  %1121 = vmatprep.subr.bf16.mxu0 0
  %1122 = vmatpush1.bf16.xpose.msra.mxu0 0
  %1123 = vmatprep.subr.bf16.mxu0 0
  %1124 = vmatpush1.bf16.xpose.msra.mxu0 0
  %1125 = vmatprep.subr.bf16.mxu0 0
  %1126 = vmatpush1.bf16.xpose.msra.mxu0 0
  %1127 = vmatprep.subr.bf16.mxu0 0
  %1128 = vmatpush1.bf16.xpose.msra.mxu0 0
  %1129 = vmatprep.subr.bf16.mxu0 0
  %1130 = vmatpush1.bf16.xpose.msra.mxu0 0
  %1131 = vmatprep.subr.bf16.mxu0 0
  %1132 = vmatpush1.bf16.xpose.msra.mxu0 0
  %1133 = vmatprep.subr.bf16.mxu0 0
  %1134 = vmatpush1.bf16.xpose.msra.mxu0 0
  %1135 = vmatprep.subr.bf16.mxu0 0
  %1136 = vmatpush1.bf16.xpose.msra.mxu0 0
  %1137 = vmatprep.subr.bf16.mxu0 0
  %1138 = vmatpush1.bf16.xpose.msra.mxu0 0
  %1139 = vmatprep.subr.bf16.mxu0 0
  %1140 = vmatpush1.bf16.xpose.msra.mxu0 0
  %1141 = vmatprep.subr.bf16.mxu0 0
  %1142 = vmatpush1.bf16.xpose.msra.mxu0 0
  %1143 = vmatprep.subr.bf16.mxu0 0
  %1144 = vmatpush1.bf16.xpose.msra.mxu0 0
  %1145 = vmatprep.subr.bf16.mxu0 0
  %1146 = vmatpush1.bf16.xpose.msra.mxu0 0
  %1147 = vmatprep.subr.bf16.mxu0 0
  %1148 = vmatpush1.bf16.xpose.msra.mxu0 0
  %1149 = vmatprep.subr.bf16.mxu0 0
  %1150 = vmatpush1.bf16.xpose.msra.mxu0 0
  %1151 = vmatprep.mubr.bf16.mxu0 0
  %1152 = vmatmul.mubr.bf16.gmra.mrb[0].mxu0 %v1114
  %v1153 = vpop.f32.mrb[0].mxu0
  %v1154 = vadd.f32 0.0, %v1153
  %v1155 = vpop.f32.mrb[0].mxu0
  %v1156 = vpop.f32.mrb[0].mxu0
  %v1157 = vpop.f32.mrb[0].mxu0
  %1158 = vdwg.mxu0
  %v1159 = vmul.f32 %v1154, 0.17677669
  %1160 = vrot.lane.b32.xlu0 %v1109, 96
  %v1161 = vpop.permute.xlu0 %1160
  %1162 = vrot.lane.b32.xlu0 %v1109, 32
  %v1163 = vpop.permute.xlu0 %1162
  %v1165 = vsel %vm144, %v1161, 0
  %v1168 = vsel %vm144, %v1163, 0
  %1170 = vmatprep.subr.bf16.mxu0 0
  %1171 = vmatpush1.bf16.xpose.msra.mxu0 %v1168
  %1172 = vmatprep.subr.bf16.mxu0 0
  %1173 = vmatpush1.bf16.xpose.msra.mxu0 0
  %1174 = vmatprep.subr.bf16.mxu0 0
  %1175 = vmatpush1.bf16.xpose.msra.mxu0 0
  %1176 = vmatprep.subr.bf16.mxu0 0
  %1177 = vmatpush1.bf16.xpose.msra.mxu0 0
  %1178 = vmatprep.subr.bf16.mxu0 0
  %1179 = vmatpush1.bf16.xpose.msra.mxu0 0
  %1180 = vmatprep.subr.bf16.mxu0 0
  %1181 = vmatpush1.bf16.xpose.msra.mxu0 0
  %1182 = vmatprep.subr.bf16.mxu0 0
  %1183 = vmatpush1.bf16.xpose.msra.mxu0 0
  %1184 = vmatprep.subr.bf16.mxu0 0
  %1185 = vmatpush1.bf16.xpose.msra.mxu0 0
  %1186 = vmatprep.subr.bf16.mxu0 0
  %1187 = vmatpush1.bf16.xpose.msra.mxu0 0
  %1188 = vmatprep.subr.bf16.mxu0 0
  %1189 = vmatpush1.bf16.xpose.msra.mxu0 0
  %1190 = vmatprep.subr.bf16.mxu0 0
  %1191 = vmatpush1.bf16.xpose.msra.mxu0 0
  %1192 = vmatprep.subr.bf16.mxu0 0
  %1193 = vmatpush1.bf16.xpose.msra.mxu0 0
  %1194 = vmatprep.subr.bf16.mxu0 0
  %1195 = vmatpush1.bf16.xpose.msra.mxu0 0
  %1196 = vmatprep.subr.bf16.mxu0 0
  %1197 = vmatpush1.bf16.xpose.msra.mxu0 0
  %1198 = vmatprep.subr.bf16.mxu0 0
  %1199 = vmatpush1.bf16.xpose.msra.mxu0 0
  %1200 = vmatprep.subr.bf16.mxu0 0
  %1201 = vmatpush1.bf16.xpose.msra.mxu0 0
  %1202 = vmatprep.mubr.bf16.mxu0 0
  %1203 = vmatmul.mubr.bf16.gmra.mrb[0].mxu0 %v1165
  %v1204 = vpop.f32.mrb[0].mxu0
  %v1205 = vadd.f32 0.0, %v1204
  %v1206 = vpop.f32.mrb[0].mxu0
  %v1207 = vpop.f32.mrb[0].mxu0
  %v1208 = vpop.f32.mrb[0].mxu0
  %1209 = vdwg.mxu0
  %v1210 = vmul.f32 %v1205, 0.17677669
  %v1211 = vpack.c.bf16 %v1105, %v1105
  %1213 = vrot.lane.b32.xlu0 %v1211, 64
  %v1214 = vpop.permute.xlu0 %1213
  %v1216 = vsel %vm144, %v1211, 0
  %v1219 = vsel %vm144, %v1214, 0
  %1221 = vmatprep.subr.bf16.mxu0 0
  %1222 = vmatpush1.bf16.xpose.msra.mxu0 %v1219
  %1223 = vmatprep.subr.bf16.mxu0 0
  %1224 = vmatpush1.bf16.xpose.msra.mxu0 0
  %1225 = vmatprep.subr.bf16.mxu0 0
  %1226 = vmatpush1.bf16.xpose.msra.mxu0 0
  %1227 = vmatprep.subr.bf16.mxu0 0
  %1228 = vmatpush1.bf16.xpose.msra.mxu0 0
  %1229 = vmatprep.subr.bf16.mxu0 0
  %1230 = vmatpush1.bf16.xpose.msra.mxu0 0
  %1231 = vmatprep.subr.bf16.mxu0 0
  %1232 = vmatpush1.bf16.xpose.msra.mxu0 0
  %1233 = vmatprep.subr.bf16.mxu0 0
  %1234 = vmatpush1.bf16.xpose.msra.mxu0 0
  %1235 = vmatprep.subr.bf16.mxu0 0
  %1236 = vmatpush1.bf16.xpose.msra.mxu0 0
  %1237 = vmatprep.subr.bf16.mxu0 0
  %1238 = vmatpush1.bf16.xpose.msra.mxu0 0
  %1239 = vmatprep.subr.bf16.mxu0 0
  %1240 = vmatpush1.bf16.xpose.msra.mxu0 0
  %1241 = vmatprep.subr.bf16.mxu0 0
  %1242 = vmatpush1.bf16.xpose.msra.mxu0 0
  %1243 = vmatprep.subr.bf16.mxu0 0
  %1244 = vmatpush1.bf16.xpose.msra.mxu0 0
  %1245 = vmatprep.subr.bf16.mxu0 0
  %1246 = vmatpush1.bf16.xpose.msra.mxu0 0
  %1247 = vmatprep.subr.bf16.mxu0 0
  %1248 = vmatpush1.bf16.xpose.msra.mxu0 0
  %1249 = vmatprep.subr.bf16.mxu0 0
  %1250 = vmatpush1.bf16.xpose.msra.mxu0 0
  %1251 = vmatprep.subr.bf16.mxu0 0
  %1252 = vmatpush1.bf16.xpose.msra.mxu0 0
  %1253 = vmatprep.mubr.bf16.mxu0 0
  %1254 = vmatmul.mubr.bf16.gmra.mrb[0].mxu0 %v1216
  %v1255 = vpop.f32.mrb[0].mxu0
  %v1256 = vadd.f32 0.0, %v1255
  %v1257 = vpop.f32.mrb[0].mxu0
  %v1258 = vpop.f32.mrb[0].mxu0
  %v1259 = vpop.f32.mrb[0].mxu0
  %1260 = vdwg.mxu0
  %v1261 = vmul.f32 %v1256, 0.17677669
  %1262 = vrot.lane.b32.xlu0 %v1211, 96
  %v1263 = vpop.permute.xlu0 %1262
  %1264 = vrot.lane.b32.xlu0 %v1211, 32
  %v1265 = vpop.permute.xlu0 %1264
  %v1267 = vsel %vm144, %v1263, 0
  %v1270 = vsel %vm144, %v1265, 0
  %1272 = vmatprep.subr.bf16.mxu0 0
  %1273 = vmatpush1.bf16.xpose.msra.mxu0 %v1270
  %1274 = vmatprep.subr.bf16.mxu0 0
  %1275 = vmatpush1.bf16.xpose.msra.mxu0 0
  %1276 = vmatprep.subr.bf16.mxu0 0
  %1277 = vmatpush1.bf16.xpose.msra.mxu0 0
  %1278 = vmatprep.subr.bf16.mxu0 0
  %1279 = vmatpush1.bf16.xpose.msra.mxu0 0
  %1280 = vmatprep.subr.bf16.mxu0 0
  %1281 = vmatpush1.bf16.xpose.msra.mxu0 0
  %1282 = vmatprep.subr.bf16.mxu0 0
  %1283 = vmatpush1.bf16.xpose.msra.mxu0 0
  %1284 = vmatprep.subr.bf16.mxu0 0
  %1285 = vmatpush1.bf16.xpose.msra.mxu0 0
  %1286 = vmatprep.subr.bf16.mxu0 0
  %1287 = vmatpush1.bf16.xpose.msra.mxu0 0
  %1288 = vmatprep.subr.bf16.mxu0 0
  %1289 = vmatpush1.bf16.xpose.msra.mxu0 0
  %1290 = vmatprep.subr.bf16.mxu0 0
  %1291 = vmatpush1.bf16.xpose.msra.mxu0 0
  %1292 = vmatprep.subr.bf16.mxu0 0
  %1293 = vmatpush1.bf16.xpose.msra.mxu0 0
  %1294 = vmatprep.subr.bf16.mxu0 0
  %1295 = vmatpush1.bf16.xpose.msra.mxu0 0
  %1296 = vmatprep.subr.bf16.mxu0 0
  %1297 = vmatpush1.bf16.xpose.msra.mxu0 0
  %1298 = vmatprep.subr.bf16.mxu0 0
  %1299 = vmatpush1.bf16.xpose.msra.mxu0 0
  %1300 = vmatprep.subr.bf16.mxu0 0
  %1301 = vmatpush1.bf16.xpose.msra.mxu0 0
  %1302 = vmatprep.subr.bf16.mxu0 0
  %1303 = vmatpush1.bf16.xpose.msra.mxu0 0
  %1304 = vmatprep.mubr.bf16.mxu0 0
  %1305 = vmatmul.mubr.bf16.gmra.mrb[0].mxu0 %v1267
  %v1306 = vpop.f32.mrb[0].mxu0
  %v1307 = vadd.f32 0.0, %v1306
  %v1308 = vpop.f32.mrb[0].mxu0
  %v1309 = vpop.f32.mrb[0].mxu0
  %v1310 = vpop.f32.mrb[0].mxu0
  %1311 = vdwg.mxu0
  %v1312 = vmul.f32 %v1307, 0.17677669
  %v1313 = vsel %vm424, %v1159, -inf
  %1314 = vmax.xlane.f32.xlu0 %v1313
  %v1315 = vpop.xlane.xlu0 %1314
  %v1316 = vsel %vm424, %v1210, -inf
  %1317 = vmax.xlane.f32.xlu0 %v1316
  %v1318 = vpop.xlane.xlu0 %1317
  %v1319 = vsel %vm424, %v1261, -inf
  %1320 = vmax.xlane.f32.xlu0 %v1319
  %v1321 = vpop.xlane.xlu0 %1320
  %v1322 = vsel %vm424, %v1312, -inf
  %1323 = vmax.xlane.f32.xlu0 %v1322
  %v1324 = vpop.xlane.xlu0 %1323
  %v1325 = vsub.f32 %v1159, %v1315
  %v1326 = vsub.f32 %v1210, %v1318
  %v1327 = vsub.f32 %v1261, %v1321
  %v1328 = vsub.f32 %v1312, %v1324
  %v1329 = vmul.f32 %v1325, 1.442695
  %v1330 = vpow.pop %v1329
  %v1331 = vmul.f32 %v1326, 1.442695
  %v1332 = vpow.pop %v1331
  %v1333 = vmul.f32 %v1327, 1.442695
  %v1334 = vpow.pop %v1333
  %v1335 = vmul.f32 %v1328, 1.442695
  %v1336 = vpow.pop %v1335
  %v1337 = vsel %vm424, %v1330, 0.0
  %1338 = vadd.xlane.f32.xlu0 %v1337
  %v1339 = vpop.xlane.xlu0 %1338
  %v1340 = vsel %vm424, %v1332, 0.0
  %1341 = vadd.xlane.f32.xlu0 %v1340
  %v1342 = vpop.xlane.xlu0 %1341
  %v1343 = vsel %vm424, %v1334, 0.0
  %1344 = vadd.xlane.f32.xlu0 %v1343
  %v1345 = vpop.xlane.xlu0 %1344
  %v1346 = vsel %vm424, %v1336, 0.0
  %1347 = vadd.xlane.f32.xlu0 %v1346
  %v1348 = vpop.xlane.xlu0 %1347
  %v1349 = vrcp.pop %v1339
  %v1350 = vrcp.pop %v1342
  %v1351 = vrcp.pop %v1345
  %v1352 = vrcp.pop %v1348
  %v1353 = vmul.f32 %v1330, %v1349
  %v1354 = vmul.f32 %v1332, %v1350
  %v1355 = vmul.f32 %v1334, %v1351
  %v1356 = vmul.f32 %v1336, %v1352
  %v1357 = vpack.c.bf16 %v1353, %v1353
  %v1358 = vpack.c.bf16 %v1103, %v1103
  %v1360 = vsel %vm424, %v1357, 0
  %v1363 = vsel %vm474, %v1358, 0
  %1365 = vmatprep.subr.bf16.mxu0 0
  %1366 = vmatpush1.bf16.msra.mxu0 %v1363
  %1367 = vmatprep.subr.bf16.mxu0 0
  %1368 = vmatpush1.bf16.msra.mxu0 0
  %1369 = vmatprep.subr.bf16.mxu0 0
  %1370 = vmatpush1.bf16.msra.mxu0 0
  %1371 = vmatprep.subr.bf16.mxu0 0
  %1372 = vmatpush1.bf16.msra.mxu0 0
  %1373 = vmatprep.subr.bf16.mxu0 0
  %1374 = vmatpush1.bf16.msra.mxu0 0
  %1375 = vmatprep.subr.bf16.mxu0 0
  %1376 = vmatpush1.bf16.msra.mxu0 0
  %1377 = vmatprep.subr.bf16.mxu0 0
  %1378 = vmatpush1.bf16.msra.mxu0 0
  %1379 = vmatprep.subr.bf16.mxu0 0
  %1380 = vmatpush1.bf16.msra.mxu0 0
  %1381 = vmatprep.subr.bf16.mxu0 0
  %1382 = vmatpush1.bf16.msra.mxu0 0
  %1383 = vmatprep.subr.bf16.mxu0 0
  %1384 = vmatpush1.bf16.msra.mxu0 0
  %1385 = vmatprep.subr.bf16.mxu0 0
  %1386 = vmatpush1.bf16.msra.mxu0 0
  %1387 = vmatprep.subr.bf16.mxu0 0
  %1388 = vmatpush1.bf16.msra.mxu0 0
  %1389 = vmatprep.subr.bf16.mxu0 0
  %1390 = vmatpush1.bf16.msra.mxu0 0
  %1391 = vmatprep.subr.bf16.mxu0 0
  %1392 = vmatpush1.bf16.msra.mxu0 0
  %1393 = vmatprep.subr.bf16.mxu0 0
  %1394 = vmatpush1.bf16.msra.mxu0 0
  %1395 = vmatprep.subr.bf16.mxu0 0
  %1396 = vmatpush1.bf16.msra.mxu0 0
  %1397 = vmatprep.mubr.bf16.mxu0 0
  %1398 = vmatmul.mubr.bf16.gmra.mrb[0].mxu0 %v1360
  %v1399 = vpop.f32.mrb[0].mxu0
  %v1400 = vadd.f32 0.0, %v1399
  %v1401 = vpop.f32.mrb[0].mxu0
  %v1402 = vpop.f32.mrb[0].mxu0
  %v1403 = vpop.f32.mrb[0].mxu0
  %1404 = vdwg.mxu0
  %v1405 = vpack.c.bf16 %v1354, %v1354
  %1407 = vrot.lane.b32.xlu0 %v1358, 96
  %v1408 = vpop.permute.xlu0 %1407
  %v1410 = vsel %vm424, %v1405, 0
  %v1413 = vsel %vm474, %v1408, 0
  %1415 = vmatprep.subr.bf16.mxu0 0
  %1416 = vmatpush1.bf16.msra.mxu0 %v1413
  %1417 = vmatprep.subr.bf16.mxu0 0
  %1418 = vmatpush1.bf16.msra.mxu0 0
  %1419 = vmatprep.subr.bf16.mxu0 0
  %1420 = vmatpush1.bf16.msra.mxu0 0
  %1421 = vmatprep.subr.bf16.mxu0 0
  %1422 = vmatpush1.bf16.msra.mxu0 0
  %1423 = vmatprep.subr.bf16.mxu0 0
  %1424 = vmatpush1.bf16.msra.mxu0 0
  %1425 = vmatprep.subr.bf16.mxu0 0
  %1426 = vmatpush1.bf16.msra.mxu0 0
  %1427 = vmatprep.subr.bf16.mxu0 0
  %1428 = vmatpush1.bf16.msra.mxu0 0
  %1429 = vmatprep.subr.bf16.mxu0 0
  %1430 = vmatpush1.bf16.msra.mxu0 0
  %1431 = vmatprep.subr.bf16.mxu0 0
  %1432 = vmatpush1.bf16.msra.mxu0 0
  %1433 = vmatprep.subr.bf16.mxu0 0
  %1434 = vmatpush1.bf16.msra.mxu0 0
  %1435 = vmatprep.subr.bf16.mxu0 0
  %1436 = vmatpush1.bf16.msra.mxu0 0
  %1437 = vmatprep.subr.bf16.mxu0 0
  %1438 = vmatpush1.bf16.msra.mxu0 0
  %1439 = vmatprep.subr.bf16.mxu0 0
  %1440 = vmatpush1.bf16.msra.mxu0 0
  %1441 = vmatprep.subr.bf16.mxu0 0
  %1442 = vmatpush1.bf16.msra.mxu0 0
  %1443 = vmatprep.subr.bf16.mxu0 0
  %1444 = vmatpush1.bf16.msra.mxu0 0
  %1445 = vmatprep.subr.bf16.mxu0 0
  %1446 = vmatpush1.bf16.msra.mxu0 0
  %1447 = vmatprep.mubr.bf16.mxu0 0
  %1448 = vmatmul.mubr.bf16.gmra.mrb[0].mxu0 %v1410
  %v1449 = vpop.f32.mrb[0].mxu0
  %v1450 = vadd.f32 0.0, %v1449
  %v1451 = vpop.f32.mrb[0].mxu0
  %v1452 = vpop.f32.mrb[0].mxu0
  %v1453 = vpop.f32.mrb[0].mxu0
  %1454 = vdwg.mxu0
  %1456 = vrot.lane.b32.xlu0 %v1450, 32
  %v1457 = vpop.permute.xlu0 %1456
  %v1459 = vsel %vm144, %v1400, %v1457
  %v1460 = vpack.c.bf16 %v1355, %v1355
  %v1461 = vpack.c.bf16 %v1107, %v1107
  %v1463 = vsel %vm424, %v1460, 0
  %v1466 = vsel %vm474, %v1461, 0
  %1468 = vmatprep.subr.bf16.mxu0 0
  %1469 = vmatpush1.bf16.msra.mxu0 %v1466
  %1470 = vmatprep.subr.bf16.mxu0 0
  %1471 = vmatpush1.bf16.msra.mxu0 0
  %1472 = vmatprep.subr.bf16.mxu0 0
  %1473 = vmatpush1.bf16.msra.mxu0 0
  %1474 = vmatprep.subr.bf16.mxu0 0
  %1475 = vmatpush1.bf16.msra.mxu0 0
  %1476 = vmatprep.subr.bf16.mxu0 0
  %1477 = vmatpush1.bf16.msra.mxu0 0
  %1478 = vmatprep.subr.bf16.mxu0 0
  %1479 = vmatpush1.bf16.msra.mxu0 0
  %1480 = vmatprep.subr.bf16.mxu0 0
  %1481 = vmatpush1.bf16.msra.mxu0 0
  %1482 = vmatprep.subr.bf16.mxu0 0
  %1483 = vmatpush1.bf16.msra.mxu0 0
  %1484 = vmatprep.subr.bf16.mxu0 0
  %1485 = vmatpush1.bf16.msra.mxu0 0
  %1486 = vmatprep.subr.bf16.mxu0 0
  %1487 = vmatpush1.bf16.msra.mxu0 0
  %1488 = vmatprep.subr.bf16.mxu0 0
  %1489 = vmatpush1.bf16.msra.mxu0 0
  %1490 = vmatprep.subr.bf16.mxu0 0
  %1491 = vmatpush1.bf16.msra.mxu0 0
  %1492 = vmatprep.subr.bf16.mxu0 0
  %1493 = vmatpush1.bf16.msra.mxu0 0
  %1494 = vmatprep.subr.bf16.mxu0 0
  %1495 = vmatpush1.bf16.msra.mxu0 0
  %1496 = vmatprep.subr.bf16.mxu0 0
  %1497 = vmatpush1.bf16.msra.mxu0 0
  %1498 = vmatprep.subr.bf16.mxu0 0
  %1499 = vmatpush1.bf16.msra.mxu0 0
  %1500 = vmatprep.mubr.bf16.mxu0 0
  %1501 = vmatmul.mubr.bf16.gmra.mrb[0].mxu0 %v1463
  %v1502 = vpop.f32.mrb[0].mxu0
  %v1503 = vadd.f32 0.0, %v1502
  %v1504 = vpop.f32.mrb[0].mxu0
  %v1505 = vpop.f32.mrb[0].mxu0
  %v1506 = vpop.f32.mrb[0].mxu0
  %1507 = vdwg.mxu0
  %v1508 = vpack.c.bf16 %v1356, %v1356
  %1510 = vrot.lane.b32.xlu0 %v1461, 96
  %v1511 = vpop.permute.xlu0 %1510
  %v1513 = vsel %vm424, %v1508, 0
  %v1516 = vsel %vm474, %v1511, 0
  %1518 = vmatprep.subr.bf16.mxu0 0
  %1519 = vmatpush1.bf16.msra.mxu0 %v1516
  %1520 = vmatprep.subr.bf16.mxu0 0
  %1521 = vmatpush1.bf16.msra.mxu0 0
  %1522 = vmatprep.subr.bf16.mxu0 0
  %1523 = vmatpush1.bf16.msra.mxu0 0
  %1524 = vmatprep.subr.bf16.mxu0 0
  %1525 = vmatpush1.bf16.msra.mxu0 0
  %1526 = vmatprep.subr.bf16.mxu0 0
  %1527 = vmatpush1.bf16.msra.mxu0 0
  %1528 = vmatprep.subr.bf16.mxu0 0
  %1529 = vmatpush1.bf16.msra.mxu0 0
  %1530 = vmatprep.subr.bf16.mxu0 0
  %1531 = vmatpush1.bf16.msra.mxu0 0
  %1532 = vmatprep.subr.bf16.mxu0 0
  %1533 = vmatpush1.bf16.msra.mxu0 0
  %1534 = vmatprep.subr.bf16.mxu0 0
  %1535 = vmatpush1.bf16.msra.mxu0 0
  %1536 = vmatprep.subr.bf16.mxu0 0
  %1537 = vmatpush1.bf16.msra.mxu0 0
  %1538 = vmatprep.subr.bf16.mxu0 0
  %1539 = vmatpush1.bf16.msra.mxu0 0
  %1540 = vmatprep.subr.bf16.mxu0 0
  %1541 = vmatpush1.bf16.msra.mxu0 0
  %1542 = vmatprep.subr.bf16.mxu0 0
  %1543 = vmatpush1.bf16.msra.mxu0 0
  %1544 = vmatprep.subr.bf16.mxu0 0
  %1545 = vmatpush1.bf16.msra.mxu0 0
  %1546 = vmatprep.subr.bf16.mxu0 0
  %1547 = vmatpush1.bf16.msra.mxu0 0
  %1548 = vmatprep.subr.bf16.mxu0 0
  %1549 = vmatpush1.bf16.msra.mxu0 0
  %1550 = vmatprep.mubr.bf16.mxu0 0
  %1551 = vmatmul.mubr.bf16.gmra.mrb[0].mxu0 %v1513
  %v1552 = vpop.f32.mrb[0].mxu0
  %v1553 = vadd.f32 0.0, %v1552
  %v1554 = vpop.f32.mrb[0].mxu0
  %v1555 = vpop.f32.mrb[0].mxu0
  %v1556 = vpop.f32.mrb[0].mxu0
  %1557 = vdwg.mxu0
  %1559 = vrot.lane.b32.xlu0 %v1553, 32
  %v1560 = vpop.permute.xlu0 %1559
  %v1562 = vsel %vm144, %v1503, %v1560
  %s1563 = scalar_lea.vmem %s7, 32
  %v1564 = vld [vmem:[%s1563] sm:$0xf]
  %v1565 = vld [vmem:[%s1563 + $0x4] sm:$0xf]
  %v1566 = vld [vmem:[%s1563 + $0x8] sm:$0xf]
  %v1567 = vld [vmem:[%s1563 + $0xc] sm:$0xf]
  %v1568 = vld [vmem:[%s1563 + $0x10] sm:$0xf]
  %v1569 = vld [vmem:[%s1563 + $0x14] sm:$0xf]
  %v1570 = vld [vmem:[%s1563 + $0x18] sm:$0xf]
  %v1571 = vld [vmem:[%s1563 + $0x1c] sm:$0xf]
  %v1572 = vpack.c.bf16 %v1562, %v1459
  %s1573 = scalar_lea.vmem %s8, 1
  %v1574 = vld [vmem:[%s1573] sm:$0x1]
  %v1576 = vlaneseq
  %v1577 = vshrl.u32 %v1576, 7
  %v1578 = vsub.s32 0, %v1577
  %v1579 = vrot.slane %v1574, %v1578
  %v1589 = vunpack.c.l.b16 %v1564
  %v1590 = vunpack.c.l.b16 %v1565
  %v1591 = vunpack.c.l.b16 %v1566
  %v1592 = vunpack.c.l.b16 %v1567
  %v1593 = vunpack.c.l.b16 %v1568
  %v1594 = vunpack.c.l.b16 %v1569
  %v1595 = vunpack.c.l.b16 %v1570
  %v1596 = vunpack.c.l.b16 %v1571
  %v1597 = vpack.c.b16 %v1590, %v1589
  %v1598 = vpack.c.b16 %v1592, %v1591
  %v1599 = vpack.c.b16 %v1594, %v1593
  %v1600 = vpack.c.b16 %v1596, %v1595
  %v1606 = vsel %vm716, %v1572, 0
  %1608 = vmatprep.subr.bf16.mxu0 0
  %1609 = vmatpush1.bf16.msra.mxu0 %v1597
  %1610 = vmatprep.subr.bf16.mxu0 0
  %1611 = vmatpush1.bf16.msra.mxu0 %v1598
  %1612 = vmatprep.subr.bf16.mxu0 0
  %1613 = vmatpush1.bf16.msra.mxu0 %v1599
  %1614 = vmatprep.subr.bf16.mxu0 0
  %1615 = vmatpush1.bf16.msra.mxu0 %v1600
  %1616 = vmatprep.subr.bf16.mxu0 0
  %1617 = vmatpush1.bf16.msra.mxu0 0
  %1618 = vmatprep.subr.bf16.mxu0 0
  %1619 = vmatpush1.bf16.msra.mxu0 0
  %1620 = vmatprep.subr.bf16.mxu0 0
  %1621 = vmatpush1.bf16.msra.mxu0 0
  %1622 = vmatprep.subr.bf16.mxu0 0
  %1623 = vmatpush1.bf16.msra.mxu0 0
  %1624 = vmatprep.subr.bf16.mxu0 0
  %1625 = vmatpush1.bf16.msra.mxu0 0
  %1626 = vmatprep.subr.bf16.mxu0 0
  %1627 = vmatpush1.bf16.msra.mxu0 0
  %1628 = vmatprep.subr.bf16.mxu0 0
  %1629 = vmatpush1.bf16.msra.mxu0 0
  %1630 = vmatprep.subr.bf16.mxu0 0
  %1631 = vmatpush1.bf16.msra.mxu0 0
  %1632 = vmatprep.subr.bf16.mxu0 0
  %1633 = vmatpush1.bf16.msra.mxu0 0
  %1634 = vmatprep.subr.bf16.mxu0 0
  %1635 = vmatpush1.bf16.msra.mxu0 0
  %1636 = vmatprep.subr.bf16.mxu0 0
  %1637 = vmatpush1.bf16.msra.mxu0 0
  %1638 = vmatprep.subr.bf16.mxu0 0
  %1639 = vmatpush1.bf16.msra.mxu0 0
  %1640 = vmatprep.mubr.bf16.mxu0 0
  %1641 = vmatmul.mubr.bf16.gmra.mrb[0].mxu0 %v1606
  %v1642 = vpop.f32.mrb[0].mxu0
  %v1643 = vadd.f32 %v1579, %v1642
  %v1644 = vpop.f32.mrb[0].mxu0
  %v1645 = vpop.f32.mrb[0].mxu0
  %v1646 = vadd.f32 %v1579, %v1645
  %v1647 = vpop.f32.mrb[0].mxu0
  %1648 = vdwg.mxu0
  %v1649 = vadd.f32 %v1643, %v1035
  %v1650 = vadd.f32 %v1646, %v1036
  %s1651 = scalar_lea.vmem %s9, 1
  %v1652 = vld [vmem:[%s1651] sm:$0x1]
  %s1653 = scalar_lea.vmem %s10, 1
  %v1654 = vld [vmem:[%s1653] sm:$0x1]
  %v1655 = vsel %vm144, %v1649, 0.0
  %1656 = vadd.xlane.f32.xlu0 %v1655
  %v1657 = vpop.xlane.xlu0 %1656
  %v1658 = vsel %vm144, %v1650, 0.0
  %1659 = vadd.xlane.f32.xlu0 %v1658
  %v1660 = vpop.xlane.xlu0 %1659
  %v1661 = vmul.f32 %v1657, %v771
  %v1662 = vmul.f32 %v1660, %v771
  %v1663 = vsub.f32 %v1649, %v1661
  %v1664 = vsub.f32 %v1650, %v1662
  %v1665 = vmul.f32 %v1663, %v1663
  %v1666 = vmul.f32 %v1664, %v1664
  %v1667 = vsel %vm144, %v1665, 0.0
  %1668 = vadd.xlane.f32.xlu0 %v1667
  %v1669 = vpop.xlane.xlu0 %1668
  %v1670 = vsel %vm144, %v1666, 0.0
  %1671 = vadd.xlane.f32.xlu0 %v1670
  %v1672 = vpop.xlane.xlu0 %1671
  %v1673 = vmul.f32 %v1669, %v771
  %v1674 = vmul.f32 %v1672, %v771
  %v1675 = vadd.f32 %v1673, 1e-05
  %v1676 = vadd.f32 %v1674, 1e-05
  %v1677 = vrsqrt.pop %v1675
  %v1678 = vrsqrt.pop %v1676
  %v1679 = vmul.f32 %v1663, %v1677
  %v1680 = vmul.f32 %v1664, %v1678
  %v1682 = vlaneseq
  %v1683 = vshrl.u32 %v1682, 7
  %v1684 = vsub.s32 0, %v1683
  %v1685 = vrot.slane %v1652, %v1684
  %v1687 = vmul.f32 %v1679, %v1685
  %v1688 = vmul.f32 %v1680, %v1685
  %v1690 = vlaneseq
  %v1691 = vshrl.u32 %v1690, 7
  %v1692 = vsub.s32 0, %v1691
  %v1693 = vrot.slane %v1654, %v1692
  %v1695 = vadd.f32 %v1687, %v1693
  %v1696 = vadd.f32 %v1688, %v1693
  %s1697 = scalar_lea.vmem %s11, 16
  %v1698 = vld [vmem:[%s1697] sm:$0xf]
  %v1699 = vld [vmem:[%s1697 + $0x4] sm:$0xf]
  %v1700 = vld [vmem:[%s1697 + $0x8] sm:$0xf]
  %v1701 = vld [vmem:[%s1697 + $0xc] sm:$0xf]
  %v1702 = vpack.c.bf16 %v1696, %v1695
  %s1703 = scalar_lea.vmem %s12, 1
  %v1704 = vld [vmem:[%s1703] sm:$0x1]
  %v1706 = vlaneseq
  %v1707 = vshrl.u32 %v1706, 7
  %v1708 = vsub.s32 0, %v1707
  %v1709 = vrot.slane %v1704, %v1708
  %v1715 = vunpack.c.l.b16 %v1698
  %v1716 = vunpack.c.l.b16 %v1699
  %v1717 = vunpack.c.l.b16 %v1700
  %v1718 = vunpack.c.l.b16 %v1701
  %v1719 = vpack.c.b16 %v1716, %v1715
  %v1720 = vpack.c.b16 %v1718, %v1717
  %v1724 = vsel %vm144, %v1702, 0
  %1726 = vmatprep.subr.bf16.mxu0 0
  %1727 = vmatpush1.bf16.msra.mxu0 %v1719
  %1728 = vmatprep.subr.bf16.mxu0 0
  %1729 = vmatpush1.bf16.msra.mxu0 %v1720
  %1730 = vmatprep.subr.bf16.mxu0 0
  %1731 = vmatpush1.bf16.msra.mxu0 0
  %1732 = vmatprep.subr.bf16.mxu0 0
  %1733 = vmatpush1.bf16.msra.mxu0 0
  %1734 = vmatprep.subr.bf16.mxu0 0
  %1735 = vmatpush1.bf16.msra.mxu0 0
  %1736 = vmatprep.subr.bf16.mxu0 0
  %1737 = vmatpush1.bf16.msra.mxu0 0
  %1738 = vmatprep.subr.bf16.mxu0 0
  %1739 = vmatpush1.bf16.msra.mxu0 0
  %1740 = vmatprep.subr.bf16.mxu0 0
  %1741 = vmatpush1.bf16.msra.mxu0 0
  %1742 = vmatprep.subr.bf16.mxu0 0
  %1743 = vmatpush1.bf16.msra.mxu0 0
  %1744 = vmatprep.subr.bf16.mxu0 0
  %1745 = vmatpush1.bf16.msra.mxu0 0
  %1746 = vmatprep.subr.bf16.mxu0 0
  %1747 = vmatpush1.bf16.msra.mxu0 0
  %1748 = vmatprep.subr.bf16.mxu0 0
  %1749 = vmatpush1.bf16.msra.mxu0 0
  %1750 = vmatprep.subr.bf16.mxu0 0
  %1751 = vmatpush1.bf16.msra.mxu0 0
  %1752 = vmatprep.subr.bf16.mxu0 0
  %1753 = vmatpush1.bf16.msra.mxu0 0
  %1754 = vmatprep.subr.bf16.mxu0 0
  %1755 = vmatpush1.bf16.msra.mxu0 0
  %1756 = vmatprep.subr.bf16.mxu0 0
  %1757 = vmatpush1.bf16.msra.mxu0 0
  %1758 = vmatprep.mubr.bf16.mxu0 0
  %1759 = vmatmul.mubr.bf16.gmra.mrb[0].mxu0 %v1724
  %v1760 = vpop.f32.mrb[0].mxu0
  %v1761 = vadd.f32 %v1709, %v1760
  %v1762 = vpop.f32.mrb[0].mxu0
  %v1763 = vpop.f32.mrb[0].mxu0
  %v1764 = vadd.f32 %v1709, %v1763
  %v1765 = vpop.f32.mrb[0].mxu0
  %1766 = vdwg.mxu0
  %v1767 = vmax.f32 %v1761, 0.0
  %v1768 = vmax.f32 %v1764, 0.0
  %s1769 = scalar_lea.vmem %s13, 64
  %v1770 = vld [vmem:[%s1769] sm:$0xf]
  %v1771 = vld [vmem:[%s1769 + $0x4] sm:$0xf]
  %v1772 = vld [vmem:[%s1769 + $0x8] sm:$0xf]
  %v1773 = vld [vmem:[%s1769 + $0xc] sm:$0xf]
  %v1774 = vld [vmem:[%s1769 + $0x10] sm:$0xf]
  %v1775 = vld [vmem:[%s1769 + $0x14] sm:$0xf]
  %v1776 = vld [vmem:[%s1769 + $0x18] sm:$0xf]
  %v1777 = vld [vmem:[%s1769 + $0x1c] sm:$0xf]
  %v1778 = vld [vmem:[%s1769 + $0x20] sm:$0xf]
  %v1779 = vld [vmem:[%s1769 + $0x24] sm:$0xf]
  %v1780 = vld [vmem:[%s1769 + $0x28] sm:$0xf]
  %v1781 = vld [vmem:[%s1769 + $0x2c] sm:$0xf]
  %v1782 = vld [vmem:[%s1769 + $0x30] sm:$0xf]
  %v1783 = vld [vmem:[%s1769 + $0x34] sm:$0xf]
  %v1784 = vld [vmem:[%s1769 + $0x38] sm:$0xf]
  %v1785 = vld [vmem:[%s1769 + $0x3c] sm:$0xf]
  %v1786 = vpack.c.bf16 %v1768, %v1767
  %s1787 = scalar_lea.vmem %s14, 1
  %v1788 = vld [vmem:[%s1787] sm:$0x1]
  %v1790 = vlaneseq
  %v1791 = vshrl.u32 %v1790, 7
  %v1792 = vsub.s32 0, %v1791
  %v1793 = vrot.slane %v1788, %v1792
  %v1811 = vunpack.c.l.b16 %v1770
  %v1812 = vunpack.c.l.b16 %v1771
  %v1813 = vunpack.c.l.b16 %v1772
  %v1814 = vunpack.c.l.b16 %v1773
  %v1815 = vunpack.c.l.b16 %v1774
  %v1816 = vunpack.c.l.b16 %v1775
  %v1817 = vunpack.c.l.b16 %v1776
  %v1818 = vunpack.c.l.b16 %v1777
  %v1819 = vunpack.c.l.b16 %v1778
  %v1820 = vunpack.c.l.b16 %v1779
  %v1821 = vunpack.c.l.b16 %v1780
  %v1822 = vunpack.c.l.b16 %v1781
  %v1823 = vunpack.c.l.b16 %v1782
  %v1824 = vunpack.c.l.b16 %v1783
  %v1825 = vunpack.c.l.b16 %v1784
  %v1826 = vunpack.c.l.b16 %v1785
  %v1827 = vpack.c.b16 %v1812, %v1811
  %v1828 = vpack.c.b16 %v1814, %v1813
  %v1829 = vpack.c.b16 %v1816, %v1815
  %v1830 = vpack.c.b16 %v1818, %v1817
  %v1831 = vpack.c.b16 %v1820, %v1819
  %v1832 = vpack.c.b16 %v1822, %v1821
  %v1833 = vpack.c.b16 %v1824, %v1823
  %v1834 = vpack.c.b16 %v1826, %v1825
  %1843 = vmatprep.subr.bf16.mxu0 0
  %1844 = vmatpush1.bf16.msra.mxu0 %v1827
  %1845 = vmatprep.subr.bf16.mxu0 0
  %1846 = vmatpush1.bf16.msra.mxu0 %v1828
  %1847 = vmatprep.subr.bf16.mxu0 0
  %1848 = vmatpush1.bf16.msra.mxu0 %v1829
  %1849 = vmatprep.subr.bf16.mxu0 0
  %1850 = vmatpush1.bf16.msra.mxu0 %v1830
  %1851 = vmatprep.subr.bf16.mxu0 0
  %1852 = vmatpush1.bf16.msra.mxu0 %v1831
  %1853 = vmatprep.subr.bf16.mxu0 0
  %1854 = vmatpush1.bf16.msra.mxu0 %v1832
  %1855 = vmatprep.subr.bf16.mxu0 0
  %1856 = vmatpush1.bf16.msra.mxu0 %v1833
  %1857 = vmatprep.subr.bf16.mxu0 0
  %1858 = vmatpush1.bf16.msra.mxu0 %v1834
  %1859 = vmatprep.subr.bf16.mxu0 0
  %1860 = vmatpush1.bf16.msra.mxu0 0
  %1861 = vmatprep.subr.bf16.mxu0 0
  %1862 = vmatpush1.bf16.msra.mxu0 0
  %1863 = vmatprep.subr.bf16.mxu0 0
  %1864 = vmatpush1.bf16.msra.mxu0 0
  %1865 = vmatprep.subr.bf16.mxu0 0
  %1866 = vmatpush1.bf16.msra.mxu0 0
  %1867 = vmatprep.subr.bf16.mxu0 0
  %1868 = vmatpush1.bf16.msra.mxu0 0
  %1869 = vmatprep.subr.bf16.mxu0 0
  %1870 = vmatpush1.bf16.msra.mxu0 0
  %1871 = vmatprep.subr.bf16.mxu0 0
  %1872 = vmatpush1.bf16.msra.mxu0 0
  %1873 = vmatprep.subr.bf16.mxu0 0
  %1874 = vmatpush1.bf16.msra.mxu0 0
  %1875 = vmatprep.mubr.bf16.mxu0 0
  %1876 = vmatmul.mubr.bf16.gmra.mrb[0].mxu0 %v1786
  %v1877 = vpop.f32.mrb[0].mxu0
  %v1878 = vadd.f32 %v1793, %v1877
  %v1879 = vpop.f32.mrb[0].mxu0
  %v1880 = vpop.f32.mrb[0].mxu0
  %v1881 = vadd.f32 %v1793, %v1880
  %v1882 = vpop.f32.mrb[0].mxu0
  %1883 = vdwg.mxu0
  %v1884 = vadd.f32 %v1878, %v1695
  %v1885 = vadd.f32 %v1881, %v1696
  %s1886 = scalar_lea.vmem %s15, 1
  %v1887 = vld [vmem:[%s1886] sm:$0x1]
  %s1888 = scalar_lea.vmem %s16, 1
  %v1889 = vld [vmem:[%s1888] sm:$0x1]
  %v1890 = vsel %vm144, %v1884, 0.0
  %1891 = vadd.xlane.f32.xlu0 %v1890
  %v1892 = vpop.xlane.xlu0 %1891
  %v1893 = vsel %vm144, %v1885, 0.0
  %1894 = vadd.xlane.f32.xlu0 %v1893
  %v1895 = vpop.xlane.xlu0 %1894
  %v1896 = vmul.f32 %v1892, %v771
  %v1897 = vmul.f32 %v1895, %v771
  %v1898 = vsub.f32 %v1884, %v1896
  %v1899 = vsub.f32 %v1885, %v1897
  %v1900 = vmul.f32 %v1898, %v1898
  %v1901 = vmul.f32 %v1899, %v1899
  %v1902 = vsel %vm144, %v1900, 0.0
  %1903 = vadd.xlane.f32.xlu0 %v1902
  %v1904 = vpop.xlane.xlu0 %1903
  %v1905 = vsel %vm144, %v1901, 0.0
  %1906 = vadd.xlane.f32.xlu0 %v1905
  %v1907 = vpop.xlane.xlu0 %1906
  %v1908 = vmul.f32 %v1904, %v771
  %v1909 = vmul.f32 %v1907, %v771
  %v1910 = vadd.f32 %v1908, 1e-05
  %v1911 = vadd.f32 %v1909, 1e-05
  %v1912 = vrsqrt.pop %v1910
  %v1913 = vrsqrt.pop %v1911
  %v1914 = vmul.f32 %v1898, %v1912
  %v1915 = vmul.f32 %v1899, %v1913
  %v1917 = vlaneseq
  %v1918 = vshrl.u32 %v1917, 7
  %v1919 = vsub.s32 0, %v1918
  %v1920 = vrot.slane %v1887, %v1919
  %v1922 = vmul.f32 %v1914, %v1920
  %v1923 = vmul.f32 %v1915, %v1920
  %v1925 = vlaneseq
  %v1926 = vshrl.u32 %v1925, 7
  %v1927 = vsub.s32 0, %v1926
  %v1928 = vrot.slane %v1889, %v1927
  %v1930 = vadd.f32 %v1922, %v1928
  %v1931 = vadd.f32 %v1923, %v1928
  %v1932 = vld [vmem:[%s4] sm:$0xf]
  %v1933 = vld [vmem:[%s4 + $0x4] sm:$0xf]
  %v1934 = vld [vmem:[%s4 + $0x8] sm:$0xf]
  %v1935 = vld [vmem:[%s4 + $0xc] sm:$0xf]
  %v1936 = vpack.c.bf16 %v1931, %v1930
  %v1937 = vld [vmem:[%s5] sm:$0x1]
  %v1939 = vlaneseq
  %v1940 = vshrl.u32 %v1939, 7
  %v1941 = vsub.s32 0, %v1940
  %v1942 = vrot.slane %v1937, %v1941
  %v1948 = vunpack.c.l.b16 %v1932
  %v1949 = vunpack.c.l.b16 %v1933
  %v1950 = vunpack.c.l.b16 %v1934
  %v1951 = vunpack.c.l.b16 %v1935
  %v1952 = vpack.c.b16 %v1949, %v1948
  %v1953 = vpack.c.b16 %v1951, %v1950
  %v1957 = vsel %vm144, %v1936, 0
  %1959 = vmatprep.subr.bf16.mxu0 0
  %1960 = vmatpush1.bf16.msra.mxu0 %v1952
  %1961 = vmatprep.subr.bf16.mxu0 0
  %1962 = vmatpush1.bf16.msra.mxu0 %v1953
  %1963 = vmatprep.subr.bf16.mxu0 0
  %1964 = vmatpush1.bf16.msra.mxu0 0
  %1965 = vmatprep.subr.bf16.mxu0 0
  %1966 = vmatpush1.bf16.msra.mxu0 0
  %1967 = vmatprep.subr.bf16.mxu0 0
  %1968 = vmatpush1.bf16.msra.mxu0 0
  %1969 = vmatprep.subr.bf16.mxu0 0
  %1970 = vmatpush1.bf16.msra.mxu0 0
  %1971 = vmatprep.subr.bf16.mxu0 0
  %1972 = vmatpush1.bf16.msra.mxu0 0
  %1973 = vmatprep.subr.bf16.mxu0 0
  %1974 = vmatpush1.bf16.msra.mxu0 0
  %1975 = vmatprep.subr.bf16.mxu0 0
  %1976 = vmatpush1.bf16.msra.mxu0 0
  %1977 = vmatprep.subr.bf16.mxu0 0
  %1978 = vmatpush1.bf16.msra.mxu0 0
  %1979 = vmatprep.subr.bf16.mxu0 0
  %1980 = vmatpush1.bf16.msra.mxu0 0
  %1981 = vmatprep.subr.bf16.mxu0 0
  %1982 = vmatpush1.bf16.msra.mxu0 0
  %1983 = vmatprep.subr.bf16.mxu0 0
  %1984 = vmatpush1.bf16.msra.mxu0 0
  %1985 = vmatprep.subr.bf16.mxu0 0
  %1986 = vmatpush1.bf16.msra.mxu0 0
  %1987 = vmatprep.subr.bf16.mxu0 0
  %1988 = vmatpush1.bf16.msra.mxu0 0
  %1989 = vmatprep.subr.bf16.mxu0 0
  %1990 = vmatpush1.bf16.msra.mxu0 0
  %1991 = vmatprep.mubr.bf16.mxu0 0
  %1992 = vmatmul.mubr.bf16.gmra.mrb[0].mxu0 %v1957
  %v1993 = vpop.f32.mrb[0].mxu0
  %v1994 = vadd.f32 %v1942, %v1993
  %v1995 = vpop.f32.mrb[0].mxu0
  %v1996 = vpop.f32.mrb[0].mxu0
  %v1997 = vadd.f32 %v1942, %v1996
  %v1998 = vpop.f32.mrb[0].mxu0
  %1999 = vdwg.mxu0
  %2000 = vst [vmem:[%s17] sm:$0xff] %v1994
  %2001 = vst [vmem:[%s17 + $0x8] sm:$0xff] %v1997
  // Predicated region
  $region70: #{transformer_forward.1} parent=0 // pred_check
    _
  $region71: #{transformer_forward.1} parent=0 // pred_check_branch
    %2003 = sbr.rel (0) target = $region73
  $region72: #{transformer_forward.1} parent=0 // pred_region
    _
  $region73: #{transformer_forward.1} parent=0 // pred_fallthru
    _
  // Predicated region
  $region74: #{transformer_forward.1} parent=0 // pred_check
    _
  $region75: #{transformer_forward.1} parent=0 // pred_check_branch
    %2005 = sbr.rel (0) target = $region77
  $region76: #{transformer_forward.1} parent=0 // pred_region
    _
  $region77: #{transformer_forward.1} parent=0 // pred_fallthru
    _
  // Predicated region
  $region78: #{transformer_forward.1} parent=0 // pred_check
    _
  $region79: #{transformer_forward.1} parent=0 // pred_check_branch
    %2007 = sbr.rel (0) target = $region81
  $region80: #{transformer_forward.1} parent=0 // pred_region
    _
  $region81: #{transformer_forward.1} parent=0 // pred_fallthru
    _
  // Predicated region
  $region82: #{transformer_forward.1} parent=0 // pred_check
    _
  $region83: #{transformer_forward.1} parent=0 // pred_check_branch
    %2009 = sbr.rel (0) target = $region85
  $region84: #{transformer_forward.1} parent=0 // pred_region
    _
  $region85: #{transformer_forward.1} parent=0 // pred_fallthru
    _

</llo_original>
